<compile_context>
chip_gen: v6e
topology: v6e:2x2x1
jax: 0.10.0
libtpu: 0.0.40
codegen_flags: <defaults>
</compile_context>

<pallas_src>
import math
from functools import partial

import jax
import jax.numpy as jnp
from jax import lax
from jax.experimental import pallas as pl
from jax.experimental.pallas import tpu as pltpu


def _round_up(a, m):
    return ((a + m - 1) // m) * m


def reorg_reference(x, stride):
    """Pure-JAX reference mirroring the PyTorch view/permute/view sequence."""
    B, C, H, W = x.shape
    oh, ow = H // stride, W // stride
    y = x.reshape(B, C, oh, stride, ow, stride)
    y = jnp.transpose(y, (0, 1, 3, 5, 2, 4))
    return y.reshape(B, C * stride * stride, oh, ow)


# ---------------------------------------------------------------------------
# Kernel
# ---------------------------------------------------------------------------
def _reorg_kernel(bsel_ref, x_ref, o_ref, *, stride, cblk, chunk, oh, ow,
                  acc_dtype, precision):
    ss = stride * stride
    so = ss * oh                      # output rows per channel plane
    out_dtype = o_ref.dtype

    def do_chunk(c0, csz):
        # Contiguous slab of `csz` channel planes: rows = (plane, out-row i),
        # lanes = (row-phase s1, column w).  No reshape, no strided read.
        start = c0 * oh
        if not isinstance(start, int) and (chunk * oh) % 8 == 0:
            start = pl.multiple_of(start, 8)
        slab = x_ref[pl.ds(start, csz * oh), :].astype(acc_dtype)
        for p in range(ss):
            # One MXU selection matmul per (chunk, phase):
            #   y[r, j] = slab[r, s1*W + j*stride + s2],  p = s1*stride + s2.
            # HIGHEST (for the f32 path) keeps the 0/1 selection bit-exact.
            y = jnp.dot(slab, bsel_ref[p], precision=precision,
                        preferred_element_type=jnp.float32)
            y = y.astype(out_dtype)
            # Sublane-sliced stores, lane-dense up to ow (unmasked for ow>=128).
            for cr in range(csz):
                dst = (c0 + cr) * so + p * oh
                o_ref[pl.ds(dst, oh), :] = y[cr * oh:(cr + 1) * oh, :]

    n_full = cblk // chunk
    rem = cblk - n_full * chunk

    if n_full <= 8:
        for ci in range(n_full):              # short: unroll (LLO visibility)
            do_chunk(ci * chunk, chunk)
    else:
        def body(ci, carry):                  # long: bound code size / live ranges
            do_chunk(ci * chunk, chunk)
            return carry
        lax.fori_loop(0, n_full, body, 0)
    if rem:
        do_chunk(n_full * chunk, rem)


# ---------------------------------------------------------------------------
# Wrapper
# ---------------------------------------------------------------------------
def _vmem_capacity_bytes():
    try:
        info = pltpu.get_tpu_info()
        cap = int(getattr(info, "vmem_capacity_bytes", 0) or 0)
        if cap > 0:
            return cap
    except Exception:
        pass
    return 64 * 1024 * 1024   # conservative: v7x physical; v5e/v6e have 128 MiB


def reorg_pallas(x, stride):
    B, C, H, W = x.shape
    if stride == 1:
        return x                                   # stride-1 reorg is the identity
    assert H % stride == 0 and W % stride == 0, "H and W must be divisible by stride"
    oh, ow = H // stride, W // stride
    ss = stride * stride
    BC = B * C
    itemsize = x.dtype.itemsize

    # ---- dtype routing ------------------------------------------------------
    if x.dtype == jnp.bfloat16:
        acc_dtype, precision = jnp.bfloat16, lax.Precision.DEFAULT  # exact (0/1 RHS)
    elif jnp.issubdtype(x.dtype, jnp.floating) and itemsize <= 4:
        # f32/f16 through the MXU in f32.  Keep HIGHEST: it is what makes the
        # selection matmul exact for f32 -- do not downgrade to DEFAULT.
        acc_dtype, precision = jnp.float32, lax.Precision.HIGHEST
    elif jnp.issubdtype(x.dtype, jnp.integer) and itemsize <= 2:
        acc_dtype, precision = jnp.float32, lax.Precision.HIGHEST   # exact (< 2**24)
    else:
        # TODO(synk): int32/int64/f64 would be inexact through the f32 MXU path;
        # route them through the plain XLA transpose instead of faking it.
        return reorg_reference(x, stride)
    acc_itemsize = jnp.dtype(acc_dtype).itemsize

    # ---- per-generation VMEM budget / block sizing --------------------------
    phys_vmem = _vmem_capacity_bytes()
    vmem_limit = int(min(phys_vmem * 3 // 4, 96 * 1024 * 1024))

    # lane-padded VMEM footprint of one channel plane in the in/out blocks,
    # of the (double-buffered) resident bsel constant, and live bytes per chunk.
    in_c = oh * _round_up(stride * W, 128) * itemsize
    out_c = ss * oh * _round_up(ow, 128) * itemsize
    bsel_vmem = ss * _round_up(stride * W, 8) * _round_up(ow, 128) * acc_itemsize
    per_c_live = oh * stride * W * acc_itemsize + oh * ow * 4

    if 2 * (in_c + out_c) + 2 * bsel_vmem + (2 << 20) > vmem_limit:
        # TODO(synk): plane (or selection matrix) too large for any VMEM tiling.
        return reorg_reference(x, stride)

    # planes live per matmul chunk (bounds vreg pressure)
    chunk = int(max(1, min(16, (48 * 1024) // max(per_c_live, 1))))
    # planes per grid step (bounds the double-buffered DMA blocks)
    per_set = max(in_c + out_c,
                  min(12 * 1024 * 1024,
                      (vmem_limit - 2 * bsel_vmem - (2 << 20)) // 2))
    cap = max(1, per_set // (in_c + out_c))
    cap = min(cap, 64 * chunk)                 # bound the in-kernel chunk loop
    if BC >= 2:
        cap = min(cap, BC // 2)                # keep >= 2 grid steps (v7x 2 TCs)
    cap = min(cap, BC)

    # sublane-tile alignment: cblk*oh must be a multiple of 8/16/32 (f32/16b/8b)
    sub = max(8, 32 // max(itemsize, 1))
    align = sub // math.gcd(oh, sub)

    bc_pad = BC
    if BC == 1:
        cblk = 1                                   # block == full dim, always legal
    else:
        cap_a = (cap // align) * align
        if cap_a >= align:
            best = 0
            for d in range(align, cap_a + 1, align):
                if BC % d == 0:
                    best = d
            if best > 0 and 2 * best >= cap_a:
                cblk = best                        # good divisor: no padding needed
            else:
                cblk = cap_a                       # pad B*C up to a multiple of cblk
                bc_pad = _round_up(BC, cblk)
        else:
            # An aligned partial block does not fit; fall back to one full block
            # (block == full dims needs no sublane alignment).
            if 2 * BC * (in_c + out_c) + 2 * bsel_vmem + (2 << 20) <= vmem_limit:
                cblk = BC
            else:
                # TODO(synk): huge plane with odd oh -- no legal tiling fits VMEM.
                return reorg_reference(x, stride)
    chunk = min(chunk, cblk)

    # ---- constant per-phase 0/1 selection matrices (resident in VMEM) -------
    # bsel[p][l, j] = 1  iff  l == s1*W + j*stride + s2,  p = s1*stride + s2
    ph = jnp.arange(ss)
    s1 = ph // stride
    s2 = ph % stride
    lane = jnp.arange(stride * W)
    col = jnp.arange(ow)
    src = s1[:, None] * W + col[None, :] * stride + s2[:, None]          # (ss, ow)
    bsel = (lane[None, :, None] == src[:, None, :]).astype(acc_dtype)    # (ss, s*W, ow)

    # ---- free 2-D views ------------------------------------------------------
    x2 = x.reshape(BC * oh, stride * W)            # row = (plane, out-row i)
    if bc_pad != BC:
        x2 = jnp.pad(x2, ((0, (bc_pad - BC) * oh), (0, 0)))

    kernel = partial(_reorg_kernel, stride=stride, cblk=cblk, chunk=chunk,
                     oh=oh, ow=ow, acc_dtype=acc_dtype, precision=precision)

    out2 = pl.pallas_call(
        kernel,
        out_shape=jax.ShapeDtypeStruct((bc_pad * ss * oh, ow), x.dtype),
        grid_spec=pltpu.PrefetchScalarGridSpec(
            num_scalar_prefetch=0,
            grid=(bc_pad // cblk,),
            in_specs=[
                # constant: block index never changes -> stays resident
                pl.BlockSpec((ss, stride * W, ow), lambda g: (0, 0, 0)),
                pl.BlockSpec((cblk * oh, stride * W), lambda g: (g, 0)),
            ],
            out_specs=pl.BlockSpec((cblk * ss * oh, ow), lambda g: (g, 0)),
        ),
        compiler_params=pltpu.CompilerParams(
            dimension_semantics=("parallel",),
            vmem_limit_bytes=vmem_limit,
        ),
        cost_estimate=pl.CostEstimate(
            flops=2 * bc_pad * ss * oh * ow * stride * W,
            transcendentals=0,
            bytes_accessed=2 * B * C * H * W * itemsize,
        ),
    )(bsel, x2)

    if bc_pad != BC:
        out2 = out2[: BC * ss * oh]
    return out2.reshape(B, C * ss, oh, ow)         # free view


# ---------------------------------------------------------------------------
# Self-test
# ---------------------------------------------------------------------------
if __name__ == "__main__":
    key = jax.random.PRNGKey(0)

    def _check(x, stride):
        out = jax.block_until_ready(reorg_pallas(x, stride))
        ref = reorg_reference(x, stride)
        assert out.shape == ref.shape, (out.shape, ref.shape)
        assert out.dtype == x.dtype
        ok = jnp.allclose(out.astype(jnp.float32), ref.astype(jnp.float32),
                          atol=1e-5, rtol=1e-5)
        assert ok, f"mismatch: stride={stride} shape={x.shape} dtype={x.dtype}"

    # ReorgLayer has no learnable parameters -- only `stride`.
    x0 = jax.random.normal(key, (2, 4, 16, 16), dtype=jnp.float32)
    _check(x0, 2)

    keys = jax.random.split(key, 6)
    # bf16, multi-step grid
    _check(jax.random.normal(keys[0], (2, 8, 16, 16)).astype(jnp.bfloat16), 2)
    # B*C with no good divisor -> padded grid
    _check(jax.random.normal(keys[1], (1, 11, 16, 16), dtype=jnp.float32), 2)
    # stride 3, small non-multiple-of-8 oh/ow
    _check(jax.random.normal(keys[2], (2, 2, 12, 12), dtype=jnp.float32), 3)
    # sublane alignment cannot split this one -> single full block (grid = 1)
    _check(jax.random.normal(keys[3], (1, 7, 12, 12), dtype=jnp.float32), 2)
    # larger, lane-dense (ow = 128) case exercising the fori_loop chunking path
    _check(jax.random.normal(keys[4], (1, 64, 128, 256), dtype=jnp.float32), 2)
    # stride 1 fast path
    _check(jax.random.normal(keys[5], (2, 4, 16, 16), dtype=jnp.float32), 1)

    print("KERNEL_OK")
</pallas_src>

<mosaic_0001>
module attributes {stable_mosaic.version = 11 : i64} {
  func.func @_reorg_kernel(%arg0: i32, %arg1: memref<4x32x8xf32, #tpu.memory_space<vmem>>, %arg2: memref<32x32xf32, #tpu.memory_space<vmem>>, %arg3: memref<128x8xf32, #tpu.memory_space<vmem>>) attributes {dimension_semantics = [#tpu.dimension_semantics<parallel>], iteration_bounds = array<i64: 2>, scalar_prefetch = 0 : i64, scratch_operands = 0 : i64, tpu.core_type = #tpu.core_type<tc>, window_params = [{pipeline_mode = #tpu.pipeline_mode<synchronous>, transform_indices = @transform_0, window_bounds = array<i64: 4, 32, 8>}, {transform_indices = @transform_1, window_bounds = array<i64: 32, 32>}, {transform_indices = @transform_2, window_bounds = array<i64: 128, 8>}]} {
    %c0 = arith.constant 0 : index
    %c0_0 = arith.constant 0 : index
    %0 = vector.load %arg2[%c0, %c0_0] : memref<32x32xf32, #tpu.memory_space<vmem>>, vector<32x32xf32>
    %c0_1 = arith.constant 0 : index
    %c0_2 = arith.constant 0 : index
    %c0_3 = arith.constant 0 : index
    %1 = vector.load %arg1[%c0_1, %c0_2, %c0_3] : memref<4x32x8xf32, #tpu.memory_space<vmem>>, vector<1x32x8xf32>
    %2 = vector.shape_cast %1 : vector<1x32x8xf32> to vector<32x8xf32>
    %cst = arith.constant dense<0.000000e+00> : vector<32x8xf32>
    %3 = tpu.matmul %0, %2, %cst {dimension_numbers = #tpu.dot_dimension_numbers<[1], [0], [0], [1], [0, 0, 1, 1], [], []>, precision = #tpu.contract_precision<fp32>} : vector<32x32xf32>, vector<32x8xf32>, vector<32x8xf32> -> vector<32x8xf32>
    %4 = vector.extract_strided_slice %3 {offsets = [0, 0], sizes = [8, 8], strides = [1, 1]} : vector<32x8xf32> to vector<8x8xf32>
    %c0_4 = arith.constant 0 : index
    %c0_5 = arith.constant 0 : index
    %5 = vector.load %arg3[%c0_4, %c0_5] : memref<128x8xf32, #tpu.memory_space<vmem>>, vector<8x8xf32>
    tpu.vector_store %arg3[%c0_4, %c0_5], %4 {strides = array<i32>} : memref<128x8xf32, #tpu.memory_space<vmem>>, vector<8x8xf32>,
    %6 = vector.extract_strided_slice %3 {offsets = [8, 0], sizes = [8, 8], strides = [1, 1]} : vector<32x8xf32> to vector<8x8xf32>
    %c32 = arith.constant 32 : index
    %c0_6 = arith.constant 0 : index
    %7 = vector.load %arg3[%c32, %c0_6] : memref<128x8xf32, #tpu.memory_space<vmem>>, vector<8x8xf32>
    tpu.vector_store %arg3[%c32, %c0_6], %6 {strides = array<i32>} : memref<128x8xf32, #tpu.memory_space<vmem>>, vector<8x8xf32>,
    %8 = vector.extract_strided_slice %3 {offsets = [16, 0], sizes = [8, 8], strides = [1, 1]} : vector<32x8xf32> to vector<8x8xf32>
    %c64 = arith.constant 64 : index
    %c0_7 = arith.constant 0 : index
    %9 = vector.load %arg3[%c64, %c0_7] : memref<128x8xf32, #tpu.memory_space<vmem>>, vector<8x8xf32>
    tpu.vector_store %arg3[%c64, %c0_7], %8 {strides = array<i32>} : memref<128x8xf32, #tpu.memory_space<vmem>>, vector<8x8xf32>,
    %10 = vector.extract_strided_slice %3 {offsets = [24, 0], sizes = [8, 8], strides = [1, 1]} : vector<32x8xf32> to vector<8x8xf32>
    %c96 = arith.constant 96 : index
    %c0_8 = arith.constant 0 : index
    %11 = vector.load %arg3[%c96, %c0_8] : memref<128x8xf32, #tpu.memory_space<vmem>>, vector<8x8xf32>
    tpu.vector_store %arg3[%c96, %c0_8], %10 {strides = array<i32>} : memref<128x8xf32, #tpu.memory_space<vmem>>, vector<8x8xf32>,
    %c1 = arith.constant 1 : index
    %c0_9 = arith.constant 0 : index
    %c0_10 = arith.constant 0 : index
    %12 = vector.load %arg1[%c1, %c0_9, %c0_10] : memref<4x32x8xf32, #tpu.memory_space<vmem>>, vector<1x32x8xf32>
    %13 = vector.shape_cast %12 : vector<1x32x8xf32> to vector<32x8xf32>
    %cst_11 = arith.constant dense<0.000000e+00> : vector<32x8xf32>
    %14 = tpu.matmul %0, %13, %cst_11 {dimension_numbers = #tpu.dot_dimension_numbers<[1], [0], [0], [1], [0, 0, 1, 1], [], []>, precision = #tpu.contract_precision<fp32>} : vector<32x32xf32>, vector<32x8xf32>, vector<32x8xf32> -> vector<32x8xf32>
    %15 = vector.extract_strided_slice %14 {offsets = [0, 0], sizes = [8, 8], strides = [1, 1]} : vector<32x8xf32> to vector<8x8xf32>
    %c8 = arith.constant 8 : index
    %c0_12 = arith.constant 0 : index
    %16 = vector.load %arg3[%c8, %c0_12] : memref<128x8xf32, #tpu.memory_space<vmem>>, vector<8x8xf32>
    tpu.vector_store %arg3[%c8, %c0_12], %15 {strides = array<i32>} : memref<128x8xf32, #tpu.memory_space<vmem>>, vector<8x8xf32>,
    %17 = vector.extract_strided_slice %14 {offsets = [8, 0], sizes = [8, 8], strides = [1, 1]} : vector<32x8xf32> to vector<8x8xf32>
    %c40 = arith.constant 40 : index
    %c0_13 = arith.constant 0 : index
    %18 = vector.load %arg3[%c40, %c0_13] : memref<128x8xf32, #tpu.memory_space<vmem>>, vector<8x8xf32>
    tpu.vector_store %arg3[%c40, %c0_13], %17 {strides = array<i32>} : memref<128x8xf32, #tpu.memory_space<vmem>>, vector<8x8xf32>,
    %19 = vector.extract_strided_slice %14 {offsets = [16, 0], sizes = [8, 8], strides = [1, 1]} : vector<32x8xf32> to vector<8x8xf32>
    %c72 = arith.constant 72 : index
    %c0_14 = arith.constant 0 : index
    %20 = vector.load %arg3[%c72, %c0_14] : memref<128x8xf32, #tpu.memory_space<vmem>>, vector<8x8xf32>
    tpu.vector_store %arg3[%c72, %c0_14], %19 {strides = array<i32>} : memref<128x8xf32, #tpu.memory_space<vmem>>, vector<8x8xf32>,
    %21 = vector.extract_strided_slice %14 {offsets = [24, 0], sizes = [8, 8], strides = [1, 1]} : vector<32x8xf32> to vector<8x8xf32>
    %c104 = arith.constant 104 : index
    %c0_15 = arith.constant 0 : index
    %22 = vector.load %arg3[%c104, %c0_15] : memref<128x8xf32, #tpu.memory_space<vmem>>, vector<8x8xf32>
    tpu.vector_store %arg3[%c104, %c0_15], %21 {strides = array<i32>} : memref<128x8xf32, #tpu.memory_space<vmem>>, vector<8x8xf32>,
    %c2 = arith.constant 2 : index
    %c0_16 = arith.constant 0 : index
    %c0_17 = arith.constant 0 : index
    %23 = vector.load %arg1[%c2, %c0_16, %c0_17] : memref<4x32x8xf32, #tpu.memory_space<vmem>>, vector<1x32x8xf32>
    %24 = vector.shape_cast %23 : vector<1x32x8xf32> to vector<32x8xf32>
    %cst_18 = arith.constant dense<0.000000e+00> : vector<32x8xf32>
    %25 = tpu.matmul %0, %24, %cst_18 {dimension_numbers = #tpu.dot_dimension_numbers<[1], [0], [0], [1], [0, 0, 1, 1], [], []>, precision = #tpu.contract_precision<fp32>} : vector<32x32xf32>, vector<32x8xf32>, vector<32x8xf32> -> vector<32x8xf32>
    %26 = vector.extract_strided_slice %25 {offsets = [0, 0], sizes = [8, 8], strides = [1, 1]} : vector<32x8xf32> to vector<8x8xf32>
    %c16 = arith.constant 16 : index
    %c0_19 = arith.constant 0 : index
    %27 = vector.load %arg3[%c16, %c0_19] : memref<128x8xf32, #tpu.memory_space<vmem>>, vector<8x8xf32>
    tpu.vector_store %arg3[%c16, %c0_19], %26 {strides = array<i32>} : memref<128x8xf32, #tpu.memory_space<vmem>>, vector<8x8xf32>,
    %28 = vector.extract_strided_slice %25 {offsets = [8, 0], sizes = [8, 8], strides = [1, 1]} : vector<32x8xf32> to vector<8x8xf32>
    %c48 = arith.constant 48 : index
    %c0_20 = arith.constant 0 : index
    %29 = vector.load %arg3[%c48, %c0_20] : memref<128x8xf32, #tpu.memory_space<vmem>>, vector<8x8xf32>
    tpu.vector_store %arg3[%c48, %c0_20], %28 {strides = array<i32>} : memref<128x8xf32, #tpu.memory_space<vmem>>, vector<8x8xf32>,
    %30 = vector.extract_strided_slice %25 {offsets = [16, 0], sizes = [8, 8], strides = [1, 1]} : vector<32x8xf32> to vector<8x8xf32>
    %c80 = arith.constant 80 : index
    %c0_21 = arith.constant 0 : index
    %31 = vector.load %arg3[%c80, %c0_21] : memref<128x8xf32, #tpu.memory_space<vmem>>, vector<8x8xf32>
    tpu.vector_store %arg3[%c80, %c0_21], %30 {strides = array<i32>} : memref<128x8xf32, #tpu.memory_space<vmem>>, vector<8x8xf32>,
    %32 = vector.extract_strided_slice %25 {offsets = [24, 0], sizes = [8, 8], strides = [1, 1]} : vector<32x8xf32> to vector<8x8xf32>
    %c112 = arith.constant 112 : index
    %c0_22 = arith.constant 0 : index
    %33 = vector.load %arg3[%c112, %c0_22] : memref<128x8xf32, #tpu.memory_space<vmem>>, vector<8x8xf32>
    tpu.vector_store %arg3[%c112, %c0_22], %32 {strides = array<i32>} : memref<128x8xf32, #tpu.memory_space<vmem>>, vector<8x8xf32>,
    %c3 = arith.constant 3 : index
    %c0_23 = arith.constant 0 : index
    %c0_24 = arith.constant 0 : index
    %34 = vector.load %arg1[%c3, %c0_23, %c0_24] : memref<4x32x8xf32, #tpu.memory_space<vmem>>, vector<1x32x8xf32>
    %35 = vector.shape_cast %34 : vector<1x32x8xf32> to vector<32x8xf32>
    %cst_25 = arith.constant dense<0.000000e+00> : vector<32x8xf32>
    %36 = tpu.matmul %0, %35, %cst_25 {dimension_numbers = #tpu.dot_dimension_numbers<[1], [0], [0], [1], [0, 0, 1, 1], [], []>, precision = #tpu.contract_precision<fp32>} : vector<32x32xf32>, vector<32x8xf32>, vector<32x8xf32> -> vector<32x8xf32>
    %37 = vector.extract_strided_slice %36 {offsets = [0, 0], sizes = [8, 8], strides = [1, 1]} : vector<32x8xf32> to vector<8x8xf32>
    %c24 = arith.constant 24 : index
    %c0_26 = arith.constant 0 : index
    %38 = vector.load %arg3[%c24, %c0_26] : memref<128x8xf32, #tpu.memory_space<vmem>>, vector<8x8xf32>
    tpu.vector_store %arg3[%c24, %c0_26], %37 {strides = array<i32>} : memref<128x8xf32, #tpu.memory_space<vmem>>, vector<8x8xf32>,
    %39 = vector.extract_strided_slice %36 {offsets = [8, 0], sizes = [8, 8], strides = [1, 1]} : vector<32x8xf32> to vector<8x8xf32>
    %c56 = arith.constant 56 : index
    %c0_27 = arith.constant 0 : index
    %40 = vector.load %arg3[%c56, %c0_27] : memref<128x8xf32, #tpu.memory_space<vmem>>, vector<8x8xf32>
    tpu.vector_store %arg3[%c56, %c0_27], %39 {strides = array<i32>} : memref<128x8xf32, #tpu.memory_space<vmem>>, vector<8x8xf32>,
    %41 = vector.extract_strided_slice %36 {offsets = [16, 0], sizes = [8, 8], strides = [1, 1]} : vector<32x8xf32> to vector<8x8xf32>
    %c88 = arith.constant 88 : index
    %c0_28 = arith.constant 0 : index
    %42 = vector.load %arg3[%c88, %c0_28] : memref<128x8xf32, #tpu.memory_space<vmem>>, vector<8x8xf32>
    tpu.vector_store %arg3[%c88, %c0_28], %41 {strides = array<i32>} : memref<128x8xf32, #tpu.memory_space<vmem>>, vector<8x8xf32>,
    %43 = vector.extract_strided_slice %36 {offsets = [24, 0], sizes = [8, 8], strides = [1, 1]} : vector<32x8xf32> to vector<8x8xf32>
    %c120 = arith.constant 120 : index
    %c0_29 = arith.constant 0 : index
    %44 = vector.load %arg3[%c120, %c0_29] : memref<128x8xf32, #tpu.memory_space<vmem>>, vector<8x8xf32>
    tpu.vector_store %arg3[%c120, %c0_29], %43 {strides = array<i32>} : memref<128x8xf32, #tpu.memory_space<vmem>>, vector<8x8xf32>,
    return
  }
  func.func @transform_0(%arg0: i32) -> (i32, i32, i32) {
    %c0_i32 = arith.constant 0 : i32
    %c0_i32_0 = arith.constant 0 : i32
    %c0_i32_1 = arith.constant 0 : i32
    %c0_i32_2 = arith.constant 0 : i32
    return %c0_i32, %c0_i32_0, %c0_i32_1 : i32, i32, i32
  }
  func.func @transform_1(%arg0: i32) -> (i32, i32) {
    %c0_i32 = arith.constant 0 : i32
    %c0_i32_0 = arith.constant 0 : i32
    return %arg0, %c0_i32 : i32, i32
  }
  func.func @transform_2(%arg0: i32) -> (i32, i32) {
    %c0_i32 = arith.constant 0 : i32
    %c0_i32_0 = arith.constant 0 : i32
    return %arg0, %c0_i32 : i32, i32
  }
}

</mosaic_0001>

<llo_original>
// kernel: tpu_custom_call.1
$region0: #{tpu_custom_call.1}
  #allocation0 [shape = 'u32[]', space=smem, size = 0x4, offset = 0x4, fixed_abs, tag = 'smem constant byte address 0x4 - core index']
  #allocation1 [shape = 'u32[144,128]{1,0:T(1,128)}', space=vmem, size = 0x12000, scoped, tag = 'internal scratch']
  %s0 = inlined_call_operand.vmem [shape: f32[4,32,8], index: 0, kind: input, shape index: {}]
  %s1 = inlined_call_operand.vmem [shape: f32[64,32], index: 1, kind: input, shape index: {}]
  %s2 = inlined_call_operand.vmem [shape: f32[256,8], index: 2, kind: output, shape index: {}]
  %s3 = sld [smem:[#allocation0]]
  $region41: #{tpu_custom_call.1} parent=0
    _
  %s5 = ssub.s32 1, %s3
  %s6 = scalar_select 0, %s5, %s3
  loop: start=0, step=1, limit=4
  $region2: #{tpu_custom_call.1} parent=0 // loop_pre_header
    _
  $region3: #{tpu_custom_call.1} parent=0 // loop_header
    %s8 = sphi 0, %s12
    %p9 = scmp.ge.s32.totalorder %s8, 4
    %s16 = sphi 0, %s16
    %s18 = sphi 0, %s16
    %s19 = sphi 0, %s18
    %s33 = sphi 0, %s19
    %s39 = sphi 0, %s41
    %s42 = sphi 0, %s39
    %s43 = sphi 0, %s42
    %s59 = sphi 0, %s43
    %s65 = sphi 0, %s67
    %s68 = sphi 0, %s65
    %s69 = sphi 0, %s68
    %s85 = sphi 0, %s69
  $region4: #{tpu_custom_call.1} parent=0 // loop_header_branch
    %11 = sbr.rel (%p9) target = $region8
  $region5: #{tpu_custom_call.1} parent=0 // loop_body
    %s13 = ssub.s32 %s8, 1
    %s14 = ssub.s32 %s8, 2
    %s15 = sadd.s32 %s8, 1
    %s17 = sadd.s32 %s16, 1
    %p20 = scmp.eq.s32.totalorder %s8, 1
    %p21 = scmp.ne.s32.totalorder %s16, %s18
    %p22 = scmp.eq.s32.totalorder %s8, 0
    %p23 = por %p21, %p22
    %p24 = scmp.ne.s32.totalorder %s16, %s18
    %p25 = scmp.eq.s32.totalorder %s13, 1
    %p26 = por %p24, %p25
    %p27 = scmp.ne.s32.totalorder %s18, %s19
    %p28 = scmp.eq.s32.totalorder %s13, 0
    %p29 = por %p27, %p28
    %p30 = scmp.ne.s32.totalorder %s18, %s19
    %p31 = scmp.eq.s32.totalorder %s14, 1
    %p32 = por %p30, %p31
    %p34 = scmp.ne.s32.totalorder %s19, %s33
    %p35 = scmp.eq.s32.totalorder %s14, 0
    %p36 = por %p34, %p35
    %s37 = ssub.s32 %s8, %s15
    %p38 = scmp.eq.s32.totalorder %s37, 0
    %s40 = sadd.s32 %s39, 1
    %s41 = scalar_select %p38, %s39, %s40
    %p44 = pneg %p38
    %p45 = scmp.eq.s32.totalorder %s8, 1
    %p46 = por %p44, %p45
    %p47 = scmp.ne.s32.totalorder %s39, %s42
    %p48 = scmp.eq.s32.totalorder %s8, 0
    %p49 = por %p47, %p48
    %p50 = scmp.ne.s32.totalorder %s39, %s42
    %p51 = scmp.eq.s32.totalorder %s13, 1
    %p52 = por %p50, %p51
    %p53 = scmp.ne.s32.totalorder %s42, %s43
    %p54 = scmp.eq.s32.totalorder %s13, 0
    %p55 = por %p53, %p54
    %p56 = scmp.ne.s32.totalorder %s42, %s43
    %p57 = scmp.eq.s32.totalorder %s14, 1
    %p58 = por %p56, %p57
    %p60 = scmp.ne.s32.totalorder %s43, %s59
    %p61 = scmp.eq.s32.totalorder %s14, 0
    %p62 = por %p60, %p61
    %s63 = ssub.s32 %s8, %s15
    %p64 = scmp.eq.s32.totalorder %s63, 0
    %s66 = sadd.s32 %s65, 1
    %s67 = scalar_select %p64, %s65, %s66
    %p70 = pneg %p64
    %p71 = scmp.eq.s32.totalorder %s8, 1
    %p72 = por %p70, %p71
    %p73 = scmp.ne.s32.totalorder %s65, %s68
    %p74 = scmp.eq.s32.totalorder %s8, 0
    %p75 = por %p73, %p74
    %p76 = scmp.ne.s32.totalorder %s65, %s68
    %p77 = scmp.eq.s32.totalorder %s13, 1
    %p78 = por %p76, %p77
    %p79 = scmp.ne.s32.totalorder %s68, %s69
    %p80 = scmp.eq.s32.totalorder %s13, 0
    %p81 = por %p79, %p80
    %p82 = scmp.ne.s32.totalorder %s68, %s69
    %p83 = scmp.eq.s32.totalorder %s14, 1
    %p84 = por %p82, %p83
    %p86 = scmp.ne.s32.totalorder %s69, %s85
    %p87 = scmp.eq.s32.totalorder %s14, 0
    %p88 = por %p86, %p87
    %p89 = scmp.le.s32.totalorder 1, %s8
    %p90 = scmp.lt.s32.totalorder %s8, 3
    %p91 = pnand %p89, %p90
    %p92 = pneg %p91
    // Predicated region
    $region9: #{tpu_custom_call.1} parent=5 // pred_check
      _
    $region10: #{tpu_custom_call.1} parent=5 // pred_check_branch
      %94 = sbr.rel (%p91) target = $region12
    $region11: #{tpu_custom_call.1} parent=5 // pred_region
      %s95 = ssub.s32 %s8, 1
      // Predicated region
      $region13: #{tpu_custom_call.1} parent=11 // pred_check
        %p96 = pneg %p29
      $region14: #{tpu_custom_call.1} parent=11 // pred_check_branch
        %98 = sbr.rel (%p96) target = $region16
      $region15: #{tpu_custom_call.1} parent=11 // pred_region
        _
      $region16: #{tpu_custom_call.1} parent=11 // pred_fallthru
        _
    $region12: #{tpu_custom_call.1} parent=5 // pred_fallthru
      _
    %p99 = scmp.lt.s32.totalorder %s8, 2
    // Predicated region
    $region17: #{tpu_custom_call.1} parent=5 // pred_check
      %p100 = pneg %p99
    $region18: #{tpu_custom_call.1} parent=5 // pred_check_branch
      %102 = sbr.rel (%p100) target = $region20
    $region19: #{tpu_custom_call.1} parent=5 // pred_region
      // Predicated region
      $region21: #{tpu_custom_call.1} parent=19 // pred_check
        %p103 = pneg %p49
      $region22: #{tpu_custom_call.1} parent=19 // pred_check_branch
        %105 = sbr.rel (%p103) target = $region24
      $region23: #{tpu_custom_call.1} parent=19 // pred_region
        %s106 = smul.u32 4, %s8
        %p107 = scmp.lt.s32.totalorder %s106, 7
        %s108 = scalar_select %p107, %s106, 7
        %s109 = smul.addr %s108, 8
        %s110 = scalar_lea.vmem %s1, %s109
        %s111 = smul.u32 4, %s8
      $region24: #{tpu_custom_call.1} parent=19 // pred_fallthru
        _
    $region20: #{tpu_custom_call.1} parent=5 // pred_fallthru
      _
    %p112 = scmp.le.s32.totalorder 1, %s8
    %p113 = scmp.lt.s32.totalorder %s8, 3
    %p114 = pnand %p112, %p113
    %p115 = pneg %p114
    // Predicated region
    $region25: #{tpu_custom_call.1} parent=5 // pred_check
      _
    $region26: #{tpu_custom_call.1} parent=5 // pred_check_branch
      %117 = sbr.rel (%p114) target = $region28
    $region27: #{tpu_custom_call.1} parent=5 // pred_region
      %s118 = ssub.s32 %s8, 1
      %p119 = pneg %p29
      %p120 = pneg %p26
      %s121 = smul.u32 4, %s13
      %p122 = scmp.lt.s32.totalorder %s121, 7
      %s123 = scalar_select %p122, %s121, 7
      %s124 = smul.addr %s123, 8
      %s125 = scalar_lea.vmem %s1, %s124
      %p126 = pneg %p55
      %p127 = pneg %p52
      %p128 = pneg %p81
      %p129 = pneg %p78
      %s130 = smul.u32 16, %s13
      %p131 = scmp.lt.s32.totalorder %s130, 31
      %s132 = scalar_select %p131, %s130, 31
      %s133 = smul.addr %s132, 8
      %s134 = scalar_lea.vmem %s2, %s133
      %s135 = smul.u32 4, %s13
      %p136 = scmp.lt.s32.totalorder %s135, 7
      %s137 = scalar_select %p136, %s135, 7
      %s138 = smul.addr %s137, 8
      %s139 = scalar_lea.vmem %s1, %s138
      %s140 = smul.u32 4, %s13
      %s141 = smul.u32 16, %s13
      %p142 = scmp.lt.s32.totalorder %s141, 31
      %s143 = scalar_select %p142, %s141, 31
      %s144 = smul.addr %s143, 8
      %s145 = scalar_lea.vmem %s2, %s144
      %s146 = smul.u32 16, %s13
      %v147 = vld [vmem:[%s139] sm:$0xff]
      %v148 = vld [vmem:[%s139 + $0x8] sm:$0xff]
      %v149 = vld [vmem:[%s139 + $0x10] sm:$0xff]
      %v150 = vld [vmem:[%s139 + $0x18] sm:$0xff]
      %v151 = vld [vmem:[%s0] sm:$0xff]
      %v152 = vld [vmem:[%s0 + $0x8] sm:$0xff]
      %v153 = vld [vmem:[%s0 + $0x10] sm:$0xff]
      %v154 = vld [vmem:[%s0 + $0x18] sm:$0xff]
      %vm155 = vcmask 261120
      %v157 = vsel %vm155, %v147, 0
      %v160 = vsel %vm155, %v148, 0
      %v163 = vsel %vm155, %v149, 0
      %v166 = vsel %vm155, %v150, 0
      %168 = vmatprep.subr.mxu0 0.0
      %169 = vmatpush1.msra.mxu0 0.0
      %170 = vmatprep.subr.mxu0 0.0
      %171 = vmatpush1.msra.mxu0 0.0
      %172 = vmatprep.subr.mxu0 0.0
      %173 = vmatpush1.msra.mxu0 0.0
      %174 = vmatprep.subr.mxu0 0.0
      %175 = vmatpush1.msra.mxu0 0.0
      %176 = vmatprep.subr.mxu0 0.0
      %177 = vmatpush1.msra.mxu0 0.0
      %178 = vmatprep.subr.mxu0 0.0
      %179 = vmatpush1.msra.mxu0 0.0
      %180 = vmatprep.subr.mxu0 0.0
      %181 = vmatpush1.msra.mxu0 0.0
      %182 = vmatprep.subr.mxu0 0.0
      %183 = vmatpush1.msra.mxu0 0.0
      %184 = vmatprep.subr.mxu0 0.0
      %185 = vmatpush1.msra.mxu0 0.0
      %186 = vmatprep.subr.mxu0 0.0
      %187 = vmatpush1.msra.mxu0 0.0
      %188 = vmatprep.subr.mxu0 0.0
      %189 = vmatpush1.msra.mxu0 0.0
      %190 = vmatprep.subr.mxu0 0.0
      %191 = vmatpush1.msra.mxu0 0.0
      %192 = vmatprep.subr.mxu0 0.0
      %v193 = vand.u32 %v154, 4294901760
      %194 = vmatpush1.msra.mxu0 %v193
      %195 = vmatprep.subr.mxu0 0.0
      %v196 = vand.u32 %v153, 4294901760
      %197 = vmatpush1.msra.mxu0 %v196
      %198 = vmatprep.subr.mxu0 0.0
      %v199 = vand.u32 %v152, 4294901760
      %200 = vmatpush1.msra.mxu0 %v199
      %201 = vmatprep.subr.mxu0 0.0
      %v202 = vand.u32 %v151, 4294901760
      %203 = vmatpush1.msra.mxu0 %v202
      %204 = vmatprep.subr.mxu0 0.0
      %205 = vmatpush2.msra.mxu0 0.0
      %206 = vmatprep.subr.mxu0 0.0
      %207 = vmatpush2.msra.mxu0 0.0
      %208 = vmatprep.subr.mxu0 0.0
      %209 = vmatpush2.msra.mxu0 0.0
      %210 = vmatprep.subr.mxu0 0.0
      %211 = vmatpush2.msra.mxu0 0.0
      %212 = vmatprep.subr.mxu0 0.0
      %213 = vmatpush2.msra.mxu0 0.0
      %214 = vmatprep.subr.mxu0 0.0
      %215 = vmatpush2.msra.mxu0 0.0
      %216 = vmatprep.subr.mxu0 0.0
      %217 = vmatpush2.msra.mxu0 0.0
      %218 = vmatprep.subr.mxu0 0.0
      %219 = vmatpush2.msra.mxu0 0.0
      %220 = vmatprep.subr.mxu0 0.0
      %221 = vmatpush2.msra.mxu0 0.0
      %222 = vmatprep.subr.mxu0 0.0
      %223 = vmatpush2.msra.mxu0 0.0
      %224 = vmatprep.subr.mxu0 0.0
      %225 = vmatpush2.msra.mxu0 0.0
      %226 = vmatprep.subr.mxu0 0.0
      %227 = vmatpush2.msra.mxu0 0.0
      %228 = vmatprep.subr.mxu0 0.0
      %229 = vmatpush2.msra.mxu0 0.0
      %230 = vmatprep.subr.mxu0 0.0
      %231 = vmatpush2.msra.mxu0 0.0
      %232 = vmatprep.subr.mxu0 0.0
      %233 = vmatpush2.msra.mxu0 0.0
      %234 = vmatprep.subr.mxu0 0.0
      %235 = vmatpush2.msra.mxu0 0.0
      %236 = vmatprep.mubr.f32.mxu0 0.0
      %v237 = vand.u32 %v157, 4294901760
      %v238 = vsub.f32 %v157, %v237
      %v239 = vand.u32 %v238, 4294901760
      %v240 = vsub.f32 %v238, %v239
      %v241 = vand.u32 %v240, 4294901760
      %242 = vmatmul.mubr.f32.gmra.mxu0 %v241
      %v243 = vpop.f32.mrf.mxu0
      %v244 = vadd.f32 0.0, %v243
      %v245 = vpop.f32.mrf.mxu0
      %246 = vmatprep.mubr.f32.mxu0 0.0
      %v247 = vand.u32 %v160, 4294901760
      %v248 = vsub.f32 %v160, %v247
      %v249 = vand.u32 %v248, 4294901760
      %v250 = vsub.f32 %v248, %v249
      %v251 = vand.u32 %v250, 4294901760
      %252 = vmatmul.mubr.f32.gmra.mxu0 %v251
      %v253 = vpop.f32.mrf.mxu0
      %v254 = vadd.f32 0.0, %v253
      %v255 = vpop.f32.mrf.mxu0
      %256 = vmatprep.mubr.f32.mxu0 0.0
      %v257 = vand.u32 %v163, 4294901760
      %v258 = vsub.f32 %v163, %v257
      %v259 = vand.u32 %v258, 4294901760
      %v260 = vsub.f32 %v258, %v259
      %v261 = vand.u32 %v260, 4294901760
      %262 = vmatmul.mubr.f32.gmra.mxu0 %v261
      %v263 = vpop.f32.mrf.mxu0
      %v264 = vadd.f32 0.0, %v263
      %v265 = vpop.f32.mrf.mxu0
      %266 = vmatprep.mubr.f32.mxu0 0.0
      %v267 = vand.u32 %v166, 4294901760
      %v268 = vsub.f32 %v166, %v267
      %v269 = vand.u32 %v268, 4294901760
      %v270 = vsub.f32 %v268, %v269
      %v271 = vand.u32 %v270, 4294901760
      %272 = vmatmul.mubr.f32.gmra.mxu0 %v271
      %v273 = vpop.f32.mrf.mxu0
      %v274 = vadd.f32 0.0, %v273
      %v275 = vpop.f32.mrf.mxu0
      %276 = vdwg.mxu0
      %277 = vmatprep.subr.mxu0 0.0
      %278 = vmatpush1.msra.mxu0 0.0
      %279 = vmatprep.subr.mxu0 0.0
      %280 = vmatpush1.msra.mxu0 0.0
      %281 = vmatprep.subr.mxu0 0.0
      %282 = vmatpush1.msra.mxu0 0.0
      %283 = vmatprep.subr.mxu0 0.0
      %284 = vmatpush1.msra.mxu0 0.0
      %285 = vmatprep.subr.mxu0 0.0
      %286 = vmatpush1.msra.mxu0 0.0
      %287 = vmatprep.subr.mxu0 0.0
      %288 = vmatpush1.msra.mxu0 0.0
      %289 = vmatprep.subr.mxu0 0.0
      %290 = vmatpush1.msra.mxu0 0.0
      %291 = vmatprep.subr.mxu0 0.0
      %292 = vmatpush1.msra.mxu0 0.0
      %293 = vmatprep.subr.mxu0 0.0
      %294 = vmatpush1.msra.mxu0 0.0
      %295 = vmatprep.subr.mxu0 0.0
      %296 = vmatpush1.msra.mxu0 0.0
      %297 = vmatprep.subr.mxu0 0.0
      %298 = vmatpush1.msra.mxu0 0.0
      %299 = vmatprep.subr.mxu0 0.0
      %300 = vmatpush1.msra.mxu0 0.0
      %301 = vmatprep.subr.mxu0 0.0
      %v302 = vand.u32 %v154, 4294901760
      %v303 = vsub.f32 %v154, %v302
      %v304 = vand.u32 %v303, 4294901760
      %v305 = vsub.f32 %v303, %v304
      %v306 = vand.u32 %v305, 4294901760
      %307 = vmatpush1.msra.mxu0 %v306
      %308 = vmatprep.subr.mxu0 0.0
      %v309 = vand.u32 %v153, 4294901760
      %v310 = vsub.f32 %v153, %v309
      %v311 = vand.u32 %v310, 4294901760
      %v312 = vsub.f32 %v310, %v311
      %v313 = vand.u32 %v312, 4294901760
      %314 = vmatpush1.msra.mxu0 %v313
      %315 = vmatprep.subr.mxu0 0.0
      %v316 = vand.u32 %v152, 4294901760
      %v317 = vsub.f32 %v152, %v316
      %v318 = vand.u32 %v317, 4294901760
      %v319 = vsub.f32 %v317, %v318
      %v320 = vand.u32 %v319, 4294901760
      %321 = vmatpush1.msra.mxu0 %v320
      %322 = vmatprep.subr.mxu0 0.0
      %v323 = vand.u32 %v151, 4294901760
      %v324 = vsub.f32 %v151, %v323
      %v325 = vand.u32 %v324, 4294901760
      %v326 = vsub.f32 %v324, %v325
      %v327 = vand.u32 %v326, 4294901760
      %328 = vmatpush1.msra.mxu0 %v327
      %329 = vmatprep.subr.mxu0 0.0
      %330 = vmatpush2.msra.mxu0 0.0
      %331 = vmatprep.subr.mxu0 0.0
      %332 = vmatpush2.msra.mxu0 0.0
      %333 = vmatprep.subr.mxu0 0.0
      %334 = vmatpush2.msra.mxu0 0.0
      %335 = vmatprep.subr.mxu0 0.0
      %336 = vmatpush2.msra.mxu0 0.0
      %337 = vmatprep.subr.mxu0 0.0
      %338 = vmatpush2.msra.mxu0 0.0
      %339 = vmatprep.subr.mxu0 0.0
      %340 = vmatpush2.msra.mxu0 0.0
      %341 = vmatprep.subr.mxu0 0.0
      %342 = vmatpush2.msra.mxu0 0.0
      %343 = vmatprep.subr.mxu0 0.0
      %344 = vmatpush2.msra.mxu0 0.0
      %345 = vmatprep.subr.mxu0 0.0
      %346 = vmatpush2.msra.mxu0 0.0
      %347 = vmatprep.subr.mxu0 0.0
      %348 = vmatpush2.msra.mxu0 0.0
      %349 = vmatprep.subr.mxu0 0.0
      %350 = vmatpush2.msra.mxu0 0.0
      %351 = vmatprep.subr.mxu0 0.0
      %352 = vmatpush2.msra.mxu0 0.0
      %353 = vmatprep.subr.mxu0 0.0
      %354 = vmatpush2.msra.mxu0 0.0
      %355 = vmatprep.subr.mxu0 0.0
      %356 = vmatpush2.msra.mxu0 0.0
      %357 = vmatprep.subr.mxu0 0.0
      %358 = vmatpush2.msra.mxu0 0.0
      %359 = vmatprep.subr.mxu0 0.0
      %360 = vmatpush2.msra.mxu0 0.0
      %361 = vmatprep.mubr.f32.mxu0 0.0
      %v362 = vand.u32 %v157, 4294901760
      %363 = vmatmul.mubr.f32.gmra.mxu0 %v362
      %v364 = vpop.f32.mrf.mxu0
      %v365 = vadd.f32 %v244, %v364
      %v366 = vpop.f32.mrf.mxu0
      %367 = vmatprep.mubr.f32.mxu0 0.0
      %v368 = vand.u32 %v160, 4294901760
      %369 = vmatmul.mubr.f32.gmra.mxu0 %v368
      %v370 = vpop.f32.mrf.mxu0
      %v371 = vadd.f32 %v254, %v370
      %v372 = vpop.f32.mrf.mxu0
      %373 = vmatprep.mubr.f32.mxu0 0.0
      %v374 = vand.u32 %v163, 4294901760
      %375 = vmatmul.mubr.f32.gmra.mxu0 %v374
      %v376 = vpop.f32.mrf.mxu0
      %v377 = vadd.f32 %v264, %v376
      %v378 = vpop.f32.mrf.mxu0
      %379 = vmatprep.mubr.f32.mxu0 0.0
      %v380 = vand.u32 %v166, 4294901760
      %381 = vmatmul.mubr.f32.gmra.mxu0 %v380
      %v382 = vpop.f32.mrf.mxu0
      %v383 = vadd.f32 %v274, %v382
      %v384 = vpop.f32.mrf.mxu0
      %385 = vdwg.mxu0
      %386 = vmatprep.subr.mxu0 0.0
      %387 = vmatpush1.msra.mxu0 0.0
      %388 = vmatprep.subr.mxu0 0.0
      %389 = vmatpush1.msra.mxu0 0.0
      %390 = vmatprep.subr.mxu0 0.0
      %391 = vmatpush1.msra.mxu0 0.0
      %392 = vmatprep.subr.mxu0 0.0
      %393 = vmatpush1.msra.mxu0 0.0
      %394 = vmatprep.subr.mxu0 0.0
      %395 = vmatpush1.msra.mxu0 0.0
      %396 = vmatprep.subr.mxu0 0.0
      %397 = vmatpush1.msra.mxu0 0.0
      %398 = vmatprep.subr.mxu0 0.0
      %399 = vmatpush1.msra.mxu0 0.0
      %400 = vmatprep.subr.mxu0 0.0
      %401 = vmatpush1.msra.mxu0 0.0
      %402 = vmatprep.subr.mxu0 0.0
      %403 = vmatpush1.msra.mxu0 0.0
      %404 = vmatprep.subr.mxu0 0.0
      %405 = vmatpush1.msra.mxu0 0.0
      %406 = vmatprep.subr.mxu0 0.0
      %407 = vmatpush1.msra.mxu0 0.0
      %408 = vmatprep.subr.mxu0 0.0
      %409 = vmatpush1.msra.mxu0 0.0
      %410 = vmatprep.subr.mxu0 0.0
      %v411 = vand.u32 %v154, 4294901760
      %v412 = vsub.f32 %v154, %v411
      %413 = vmatpush1.msra.mxu0 %v412
      %414 = vmatprep.subr.mxu0 0.0
      %v415 = vand.u32 %v153, 4294901760
      %v416 = vsub.f32 %v153, %v415
      %417 = vmatpush1.msra.mxu0 %v416
      %418 = vmatprep.subr.mxu0 0.0
      %v419 = vand.u32 %v152, 4294901760
      %v420 = vsub.f32 %v152, %v419
      %421 = vmatpush1.msra.mxu0 %v420
      %422 = vmatprep.subr.mxu0 0.0
      %v423 = vand.u32 %v151, 4294901760
      %v424 = vsub.f32 %v151, %v423
      %425 = vmatpush1.msra.mxu0 %v424
      %426 = vmatprep.subr.mxu0 0.0
      %427 = vmatpush2.msra.mxu0 0.0
      %428 = vmatprep.subr.mxu0 0.0
      %429 = vmatpush2.msra.mxu0 0.0
      %430 = vmatprep.subr.mxu0 0.0
      %431 = vmatpush2.msra.mxu0 0.0
      %432 = vmatprep.subr.mxu0 0.0
      %433 = vmatpush2.msra.mxu0 0.0
      %434 = vmatprep.subr.mxu0 0.0
      %435 = vmatpush2.msra.mxu0 0.0
      %436 = vmatprep.subr.mxu0 0.0
      %437 = vmatpush2.msra.mxu0 0.0
      %438 = vmatprep.subr.mxu0 0.0
      %439 = vmatpush2.msra.mxu0 0.0
      %440 = vmatprep.subr.mxu0 0.0
      %441 = vmatpush2.msra.mxu0 0.0
      %442 = vmatprep.subr.mxu0 0.0
      %443 = vmatpush2.msra.mxu0 0.0
      %444 = vmatprep.subr.mxu0 0.0
      %445 = vmatpush2.msra.mxu0 0.0
      %446 = vmatprep.subr.mxu0 0.0
      %447 = vmatpush2.msra.mxu0 0.0
      %448 = vmatprep.subr.mxu0 0.0
      %449 = vmatpush2.msra.mxu0 0.0
      %450 = vmatprep.subr.mxu0 0.0
      %451 = vmatpush2.msra.mxu0 0.0
      %452 = vmatprep.subr.mxu0 0.0
      %453 = vmatpush2.msra.mxu0 0.0
      %454 = vmatprep.subr.mxu0 0.0
      %455 = vmatpush2.msra.mxu0 0.0
      %456 = vmatprep.subr.mxu0 0.0
      %457 = vmatpush2.msra.mxu0 0.0
      %458 = vmatprep.mubr.f32.mxu0 0.0
      %v459 = vand.u32 %v157, 4294901760
      %v460 = vsub.f32 %v157, %v459
      %461 = vmatmul.mubr.f32.gmra.mxu0 %v460
      %v462 = vpop.f32.mrf.mxu0
      %v463 = vadd.f32 %v365, %v462
      %v464 = vpop.f32.mrf.mxu0
      %465 = vmatprep.mubr.f32.mxu0 0.0
      %v466 = vand.u32 %v160, 4294901760
      %v467 = vsub.f32 %v160, %v466
      %468 = vmatmul.mubr.f32.gmra.mxu0 %v467
      %v469 = vpop.f32.mrf.mxu0
      %v470 = vadd.f32 %v371, %v469
      %v471 = vpop.f32.mrf.mxu0
      %472 = vmatprep.mubr.f32.mxu0 0.0
      %v473 = vand.u32 %v163, 4294901760
      %v474 = vsub.f32 %v163, %v473
      %475 = vmatmul.mubr.f32.gmra.mxu0 %v474
      %v476 = vpop.f32.mrf.mxu0
      %v477 = vadd.f32 %v377, %v476
      %v478 = vpop.f32.mrf.mxu0
      %479 = vmatprep.mubr.f32.mxu0 0.0
      %v480 = vand.u32 %v166, 4294901760
      %v481 = vsub.f32 %v166, %v480
      %482 = vmatmul.mubr.f32.gmra.mxu0 %v481
      %v483 = vpop.f32.mrf.mxu0
      %v484 = vadd.f32 %v383, %v483
      %v485 = vpop.f32.mrf.mxu0
      %486 = vdwg.mxu0
      %487 = vmatprep.subr.mxu0 0.0
      %488 = vmatpush1.msra.mxu0 0.0
      %489 = vmatprep.subr.mxu0 0.0
      %490 = vmatpush1.msra.mxu0 0.0
      %491 = vmatprep.subr.mxu0 0.0
      %492 = vmatpush1.msra.mxu0 0.0
      %493 = vmatprep.subr.mxu0 0.0
      %494 = vmatpush1.msra.mxu0 0.0
      %495 = vmatprep.subr.mxu0 0.0
      %496 = vmatpush1.msra.mxu0 0.0
      %497 = vmatprep.subr.mxu0 0.0
      %498 = vmatpush1.msra.mxu0 0.0
      %499 = vmatprep.subr.mxu0 0.0
      %500 = vmatpush1.msra.mxu0 0.0
      %501 = vmatprep.subr.mxu0 0.0
      %502 = vmatpush1.msra.mxu0 0.0
      %503 = vmatprep.subr.mxu0 0.0
      %504 = vmatpush1.msra.mxu0 0.0
      %505 = vmatprep.subr.mxu0 0.0
      %506 = vmatpush1.msra.mxu0 0.0
      %507 = vmatprep.subr.mxu0 0.0
      %508 = vmatpush1.msra.mxu0 0.0
      %509 = vmatprep.subr.mxu0 0.0
      %510 = vmatpush1.msra.mxu0 0.0
      %511 = vmatprep.subr.mxu0 0.0
      %v512 = vand.u32 %v154, 4294901760
      %513 = vmatpush1.msra.mxu0 %v512
      %514 = vmatprep.subr.mxu0 0.0
      %v515 = vand.u32 %v153, 4294901760
      %516 = vmatpush1.msra.mxu0 %v515
      %517 = vmatprep.subr.mxu0 0.0
      %v518 = vand.u32 %v152, 4294901760
      %519 = vmatpush1.msra.mxu0 %v518
      %520 = vmatprep.subr.mxu0 0.0
      %v521 = vand.u32 %v151, 4294901760
      %522 = vmatpush1.msra.mxu0 %v521
      %523 = vmatprep.subr.mxu0 0.0
      %524 = vmatpush2.msra.mxu0 0.0
      %525 = vmatprep.subr.mxu0 0.0
      %526 = vmatpush2.msra.mxu0 0.0
      %527 = vmatprep.subr.mxu0 0.0
      %528 = vmatpush2.msra.mxu0 0.0
      %529 = vmatprep.subr.mxu0 0.0
      %530 = vmatpush2.msra.mxu0 0.0
      %531 = vmatprep.subr.mxu0 0.0
      %532 = vmatpush2.msra.mxu0 0.0
      %533 = vmatprep.subr.mxu0 0.0
      %534 = vmatpush2.msra.mxu0 0.0
      %535 = vmatprep.subr.mxu0 0.0
      %536 = vmatpush2.msra.mxu0 0.0
      %537 = vmatprep.subr.mxu0 0.0
      %538 = vmatpush2.msra.mxu0 0.0
      %539 = vmatprep.subr.mxu0 0.0
      %540 = vmatpush2.msra.mxu0 0.0
      %541 = vmatprep.subr.mxu0 0.0
      %542 = vmatpush2.msra.mxu0 0.0
      %543 = vmatprep.subr.mxu0 0.0
      %544 = vmatpush2.msra.mxu0 0.0
      %545 = vmatprep.subr.mxu0 0.0
      %546 = vmatpush2.msra.mxu0 0.0
      %547 = vmatprep.subr.mxu0 0.0
      %548 = vmatpush2.msra.mxu0 0.0
      %549 = vmatprep.subr.mxu0 0.0
      %550 = vmatpush2.msra.mxu0 0.0
      %551 = vmatprep.subr.mxu0 0.0
      %552 = vmatpush2.msra.mxu0 0.0
      %553 = vmatprep.subr.mxu0 0.0
      %554 = vmatpush2.msra.mxu0 0.0
      %555 = vmatprep.mubr.f32.mxu0 0.0
      %v556 = vand.u32 %v157, 4294901760
      %v557 = vsub.f32 %v157, %v556
      %v558 = vand.u32 %v557, 4294901760
      %559 = vmatmul.mubr.f32.gmra.mxu0 %v558
      %v560 = vpop.f32.mrf.mxu0
      %v561 = vadd.f32 %v463, %v560
      %v562 = vpop.f32.mrf.mxu0
      %563 = vmatprep.mubr.f32.mxu0 0.0
      %v564 = vand.u32 %v160, 4294901760
      %v565 = vsub.f32 %v160, %v564
      %v566 = vand.u32 %v565, 4294901760
      %567 = vmatmul.mubr.f32.gmra.mxu0 %v566
      %v568 = vpop.f32.mrf.mxu0
      %v569 = vadd.f32 %v470, %v568
      %v570 = vpop.f32.mrf.mxu0
      %571 = vmatprep.mubr.f32.mxu0 0.0
      %v572 = vand.u32 %v163, 4294901760
      %v573 = vsub.f32 %v163, %v572
      %v574 = vand.u32 %v573, 4294901760
      %575 = vmatmul.mubr.f32.gmra.mxu0 %v574
      %v576 = vpop.f32.mrf.mxu0
      %v577 = vadd.f32 %v477, %v576
      %v578 = vpop.f32.mrf.mxu0
      %579 = vmatprep.mubr.f32.mxu0 0.0
      %v580 = vand.u32 %v166, 4294901760
      %v581 = vsub.f32 %v166, %v580
      %v582 = vand.u32 %v581, 4294901760
      %583 = vmatmul.mubr.f32.gmra.mxu0 %v582
      %v584 = vpop.f32.mrf.mxu0
      %v585 = vadd.f32 %v484, %v584
      %v586 = vpop.f32.mrf.mxu0
      %587 = vdwg.mxu0
      %588 = vmatprep.subr.mxu0 0.0
      %589 = vmatpush1.msra.mxu0 0.0
      %590 = vmatprep.subr.mxu0 0.0
      %591 = vmatpush1.msra.mxu0 0.0
      %592 = vmatprep.subr.mxu0 0.0
      %593 = vmatpush1.msra.mxu0 0.0
      %594 = vmatprep.subr.mxu0 0.0
      %595 = vmatpush1.msra.mxu0 0.0
      %596 = vmatprep.subr.mxu0 0.0
      %597 = vmatpush1.msra.mxu0 0.0
      %598 = vmatprep.subr.mxu0 0.0
      %599 = vmatpush1.msra.mxu0 0.0
      %600 = vmatprep.subr.mxu0 0.0
      %601 = vmatpush1.msra.mxu0 0.0
      %602 = vmatprep.subr.mxu0 0.0
      %603 = vmatpush1.msra.mxu0 0.0
      %604 = vmatprep.subr.mxu0 0.0
      %605 = vmatpush1.msra.mxu0 0.0
      %606 = vmatprep.subr.mxu0 0.0
      %607 = vmatpush1.msra.mxu0 0.0
      %608 = vmatprep.subr.mxu0 0.0
      %609 = vmatpush1.msra.mxu0 0.0
      %610 = vmatprep.subr.mxu0 0.0
      %611 = vmatpush1.msra.mxu0 0.0
      %612 = vmatprep.subr.mxu0 0.0
      %v613 = vand.u32 %v154, 4294901760
      %v614 = vsub.f32 %v154, %v613
      %v615 = vand.u32 %v614, 4294901760
      %616 = vmatpush1.msra.mxu0 %v615
      %617 = vmatprep.subr.mxu0 0.0
      %v618 = vand.u32 %v153, 4294901760
      %v619 = vsub.f32 %v153, %v618
      %v620 = vand.u32 %v619, 4294901760
      %621 = vmatpush1.msra.mxu0 %v620
      %622 = vmatprep.subr.mxu0 0.0
      %v623 = vand.u32 %v152, 4294901760
      %v624 = vsub.f32 %v152, %v623
      %v625 = vand.u32 %v624, 4294901760
      %626 = vmatpush1.msra.mxu0 %v625
      %627 = vmatprep.subr.mxu0 0.0
      %v628 = vand.u32 %v151, 4294901760
      %v629 = vsub.f32 %v151, %v628
      %v630 = vand.u32 %v629, 4294901760
      %631 = vmatpush1.msra.mxu0 %v630
      %632 = vmatprep.subr.mxu0 0.0
      %633 = vmatpush2.msra.mxu0 0.0
      %634 = vmatprep.subr.mxu0 0.0
      %635 = vmatpush2.msra.mxu0 0.0
      %636 = vmatprep.subr.mxu0 0.0
      %637 = vmatpush2.msra.mxu0 0.0
      %638 = vmatprep.subr.mxu0 0.0
      %639 = vmatpush2.msra.mxu0 0.0
      %640 = vmatprep.subr.mxu0 0.0
      %641 = vmatpush2.msra.mxu0 0.0
      %642 = vmatprep.subr.mxu0 0.0
      %643 = vmatpush2.msra.mxu0 0.0
      %644 = vmatprep.subr.mxu0 0.0
      %645 = vmatpush2.msra.mxu0 0.0
      %646 = vmatprep.subr.mxu0 0.0
      %647 = vmatpush2.msra.mxu0 0.0
      %648 = vmatprep.subr.mxu0 0.0
      %649 = vmatpush2.msra.mxu0 0.0
      %650 = vmatprep.subr.mxu0 0.0
      %651 = vmatpush2.msra.mxu0 0.0
      %652 = vmatprep.subr.mxu0 0.0
      %653 = vmatpush2.msra.mxu0 0.0
      %654 = vmatprep.subr.mxu0 0.0
      %655 = vmatpush2.msra.mxu0 0.0
      %656 = vmatprep.subr.mxu0 0.0
      %657 = vmatpush2.msra.mxu0 0.0
      %658 = vmatprep.subr.mxu0 0.0
      %659 = vmatpush2.msra.mxu0 0.0
      %660 = vmatprep.subr.mxu0 0.0
      %661 = vmatpush2.msra.mxu0 0.0
      %662 = vmatprep.subr.mxu0 0.0
      %663 = vmatpush2.msra.mxu0 0.0
      %664 = vmatprep.mubr.f32.mxu0 0.0
      %v665 = vand.u32 %v157, 4294901760
      %666 = vmatmul.mubr.f32.gmra.mxu0 %v665
      %v667 = vpop.f32.mrf.mxu0
      %v668 = vadd.f32 %v561, %v667
      %v669 = vpop.f32.mrf.mxu0
      %670 = vmatprep.mubr.f32.mxu0 0.0
      %v671 = vand.u32 %v160, 4294901760
      %672 = vmatmul.mubr.f32.gmra.mxu0 %v671
      %v673 = vpop.f32.mrf.mxu0
      %v674 = vadd.f32 %v569, %v673
      %v675 = vpop.f32.mrf.mxu0
      %676 = vmatprep.mubr.f32.mxu0 0.0
      %v677 = vand.u32 %v163, 4294901760
      %678 = vmatmul.mubr.f32.gmra.mxu0 %v677
      %v679 = vpop.f32.mrf.mxu0
      %v680 = vadd.f32 %v577, %v679
      %v681 = vpop.f32.mrf.mxu0
      %682 = vmatprep.mubr.f32.mxu0 0.0
      %v683 = vand.u32 %v166, 4294901760
      %684 = vmatmul.mubr.f32.gmra.mxu0 %v683
      %v685 = vpop.f32.mrf.mxu0
      %v686 = vadd.f32 %v585, %v685
      %v687 = vpop.f32.mrf.mxu0
      %688 = vdwg.mxu0
      %689 = vmatprep.subr.mxu0 0.0
      %690 = vmatpush1.msra.mxu0 0.0
      %691 = vmatprep.subr.mxu0 0.0
      %692 = vmatpush1.msra.mxu0 0.0
      %693 = vmatprep.subr.mxu0 0.0
      %694 = vmatpush1.msra.mxu0 0.0
      %695 = vmatprep.subr.mxu0 0.0
      %696 = vmatpush1.msra.mxu0 0.0
      %697 = vmatprep.subr.mxu0 0.0
      %698 = vmatpush1.msra.mxu0 0.0
      %699 = vmatprep.subr.mxu0 0.0
      %700 = vmatpush1.msra.mxu0 0.0
      %701 = vmatprep.subr.mxu0 0.0
      %702 = vmatpush1.msra.mxu0 0.0
      %703 = vmatprep.subr.mxu0 0.0
      %704 = vmatpush1.msra.mxu0 0.0
      %705 = vmatprep.subr.mxu0 0.0
      %706 = vmatpush1.msra.mxu0 0.0
      %707 = vmatprep.subr.mxu0 0.0
      %708 = vmatpush1.msra.mxu0 0.0
      %709 = vmatprep.subr.mxu0 0.0
      %710 = vmatpush1.msra.mxu0 0.0
      %711 = vmatprep.subr.mxu0 0.0
      %712 = vmatpush1.msra.mxu0 0.0
      %713 = vmatprep.subr.mxu0 0.0
      %v714 = vand.u32 %v154, 4294901760
      %715 = vmatpush1.msra.mxu0 %v714
      %716 = vmatprep.subr.mxu0 0.0
      %v717 = vand.u32 %v153, 4294901760
      %718 = vmatpush1.msra.mxu0 %v717
      %719 = vmatprep.subr.mxu0 0.0
      %v720 = vand.u32 %v152, 4294901760
      %721 = vmatpush1.msra.mxu0 %v720
      %722 = vmatprep.subr.mxu0 0.0
      %v723 = vand.u32 %v151, 4294901760
      %724 = vmatpush1.msra.mxu0 %v723
      %725 = vmatprep.subr.mxu0 0.0
      %726 = vmatpush2.msra.mxu0 0.0
      %727 = vmatprep.subr.mxu0 0.0
      %728 = vmatpush2.msra.mxu0 0.0
      %729 = vmatprep.subr.mxu0 0.0
      %730 = vmatpush2.msra.mxu0 0.0
      %731 = vmatprep.subr.mxu0 0.0
      %732 = vmatpush2.msra.mxu0 0.0
      %733 = vmatprep.subr.mxu0 0.0
      %734 = vmatpush2.msra.mxu0 0.0
      %735 = vmatprep.subr.mxu0 0.0
      %736 = vmatpush2.msra.mxu0 0.0
      %737 = vmatprep.subr.mxu0 0.0
      %738 = vmatpush2.msra.mxu0 0.0
      %739 = vmatprep.subr.mxu0 0.0
      %740 = vmatpush2.msra.mxu0 0.0
      %741 = vmatprep.subr.mxu0 0.0
      %742 = vmatpush2.msra.mxu0 0.0
      %743 = vmatprep.subr.mxu0 0.0
      %744 = vmatpush2.msra.mxu0 0.0
      %745 = vmatprep.subr.mxu0 0.0
      %746 = vmatpush2.msra.mxu0 0.0
      %747 = vmatprep.subr.mxu0 0.0
      %748 = vmatpush2.msra.mxu0 0.0
      %749 = vmatprep.subr.mxu0 0.0
      %750 = vmatpush2.msra.mxu0 0.0
      %751 = vmatprep.subr.mxu0 0.0
      %752 = vmatpush2.msra.mxu0 0.0
      %753 = vmatprep.subr.mxu0 0.0
      %754 = vmatpush2.msra.mxu0 0.0
      %755 = vmatprep.subr.mxu0 0.0
      %756 = vmatpush2.msra.mxu0 0.0
      %757 = vmatprep.mubr.f32.mxu0 0.0
      %v758 = vand.u32 %v157, 4294901760
      %759 = vmatmul.mubr.f32.gmra.mxu0 %v758
      %v760 = vpop.f32.mrf.mxu0
      %v761 = vadd.f32 %v668, %v760
      %v762 = vpop.f32.mrf.mxu0
      %763 = vmatprep.mubr.f32.mxu0 0.0
      %v764 = vand.u32 %v160, 4294901760
      %765 = vmatmul.mubr.f32.gmra.mxu0 %v764
      %v766 = vpop.f32.mrf.mxu0
      %v767 = vadd.f32 %v674, %v766
      %v768 = vpop.f32.mrf.mxu0
      %769 = vmatprep.mubr.f32.mxu0 0.0
      %v770 = vand.u32 %v163, 4294901760
      %771 = vmatmul.mubr.f32.gmra.mxu0 %v770
      %v772 = vpop.f32.mrf.mxu0
      %v773 = vadd.f32 %v680, %v772
      %v774 = vpop.f32.mrf.mxu0
      %775 = vmatprep.mubr.f32.mxu0 0.0
      %v776 = vand.u32 %v166, 4294901760
      %777 = vmatmul.mubr.f32.gmra.mxu0 %v776
      %v778 = vpop.f32.mrf.mxu0
      %v779 = vadd.f32 %v686, %v778
      %v780 = vpop.f32.mrf.mxu0
      %781 = vdwg.mxu0
      %vm782 = vcmask 64512
      %783 = vst.msk [vmem:[%s145] sm:$0xff] %vm782, %v761
      %784 = vst.msk [vmem:[%s145 + $0x20] sm:$0xff] %vm782, %v767
      %785 = vst.msk [vmem:[%s145 + $0x40] sm:$0xff] %vm782, %v773
      %786 = vst.msk [vmem:[%s145 + $0x60] sm:$0xff] %vm782, %v779
      %s787 = scalar_lea.vmem %s0, 32
      %v788 = vld [vmem:[%s787] sm:$0xff]
      %v789 = vld [vmem:[%s787 + $0x8] sm:$0xff]
      %v790 = vld [vmem:[%s787 + $0x10] sm:$0xff]
      %v791 = vld [vmem:[%s787 + $0x18] sm:$0xff]
      %792 = vmatprep.subr.mxu0 0.0
      %793 = vmatpush1.msra.mxu0 0.0
      %794 = vmatprep.subr.mxu0 0.0
      %795 = vmatpush1.msra.mxu0 0.0
      %796 = vmatprep.subr.mxu0 0.0
      %797 = vmatpush1.msra.mxu0 0.0
      %798 = vmatprep.subr.mxu0 0.0
      %799 = vmatpush1.msra.mxu0 0.0
      %800 = vmatprep.subr.mxu0 0.0
      %801 = vmatpush1.msra.mxu0 0.0
      %802 = vmatprep.subr.mxu0 0.0
      %803 = vmatpush1.msra.mxu0 0.0
      %804 = vmatprep.subr.mxu0 0.0
      %805 = vmatpush1.msra.mxu0 0.0
      %806 = vmatprep.subr.mxu0 0.0
      %807 = vmatpush1.msra.mxu0 0.0
      %808 = vmatprep.subr.mxu0 0.0
      %809 = vmatpush1.msra.mxu0 0.0
      %810 = vmatprep.subr.mxu0 0.0
      %811 = vmatpush1.msra.mxu0 0.0
      %812 = vmatprep.subr.mxu0 0.0
      %813 = vmatpush1.msra.mxu0 0.0
      %814 = vmatprep.subr.mxu0 0.0
      %815 = vmatpush1.msra.mxu0 0.0
      %816 = vmatprep.subr.mxu0 0.0
      %v817 = vand.u32 %v791, 4294901760
      %818 = vmatpush1.msra.mxu0 %v817
      %819 = vmatprep.subr.mxu0 0.0
      %v820 = vand.u32 %v790, 4294901760
      %821 = vmatpush1.msra.mxu0 %v820
      %822 = vmatprep.subr.mxu0 0.0
      %v823 = vand.u32 %v789, 4294901760
      %824 = vmatpush1.msra.mxu0 %v823
      %825 = vmatprep.subr.mxu0 0.0
      %v826 = vand.u32 %v788, 4294901760
      %827 = vmatpush1.msra.mxu0 %v826
      %828 = vmatprep.subr.mxu0 0.0
      %829 = vmatpush2.msra.mxu0 0.0
      %830 = vmatprep.subr.mxu0 0.0
      %831 = vmatpush2.msra.mxu0 0.0
      %832 = vmatprep.subr.mxu0 0.0
      %833 = vmatpush2.msra.mxu0 0.0
      %834 = vmatprep.subr.mxu0 0.0
      %835 = vmatpush2.msra.mxu0 0.0
      %836 = vmatprep.subr.mxu0 0.0
      %837 = vmatpush2.msra.mxu0 0.0
      %838 = vmatprep.subr.mxu0 0.0
      %839 = vmatpush2.msra.mxu0 0.0
      %840 = vmatprep.subr.mxu0 0.0
      %841 = vmatpush2.msra.mxu0 0.0
      %842 = vmatprep.subr.mxu0 0.0
      %843 = vmatpush2.msra.mxu0 0.0
      %844 = vmatprep.subr.mxu0 0.0
      %845 = vmatpush2.msra.mxu0 0.0
      %846 = vmatprep.subr.mxu0 0.0
      %847 = vmatpush2.msra.mxu0 0.0
      %848 = vmatprep.subr.mxu0 0.0
      %849 = vmatpush2.msra.mxu0 0.0
      %850 = vmatprep.subr.mxu0 0.0
      %851 = vmatpush2.msra.mxu0 0.0
      %852 = vmatprep.subr.mxu0 0.0
      %853 = vmatpush2.msra.mxu0 0.0
      %854 = vmatprep.subr.mxu0 0.0
      %855 = vmatpush2.msra.mxu0 0.0
      %856 = vmatprep.subr.mxu0 0.0
      %857 = vmatpush2.msra.mxu0 0.0
      %858 = vmatprep.subr.mxu0 0.0
      %859 = vmatpush2.msra.mxu0 0.0
      %860 = vmatprep.mubr.f32.mxu0 0.0
      %v861 = vand.u32 %v157, 4294901760
      %v862 = vsub.f32 %v157, %v861
      %v863 = vand.u32 %v862, 4294901760
      %v864 = vsub.f32 %v862, %v863
      %v865 = vand.u32 %v864, 4294901760
      %866 = vmatmul.mubr.f32.gmra.mxu0 %v865
      %v867 = vpop.f32.mrf.mxu0
      %v868 = vadd.f32 0.0, %v867
      %v869 = vpop.f32.mrf.mxu0
      %870 = vmatprep.mubr.f32.mxu0 0.0
      %v871 = vand.u32 %v160, 4294901760
      %v872 = vsub.f32 %v160, %v871
      %v873 = vand.u32 %v872, 4294901760
      %v874 = vsub.f32 %v872, %v873
      %v875 = vand.u32 %v874, 4294901760
      %876 = vmatmul.mubr.f32.gmra.mxu0 %v875
      %v877 = vpop.f32.mrf.mxu0
      %v878 = vadd.f32 0.0, %v877
      %v879 = vpop.f32.mrf.mxu0
      %880 = vmatprep.mubr.f32.mxu0 0.0
      %v881 = vand.u32 %v163, 4294901760
      %v882 = vsub.f32 %v163, %v881
      %v883 = vand.u32 %v882, 4294901760
      %v884 = vsub.f32 %v882, %v883
      %v885 = vand.u32 %v884, 4294901760
      %886 = vmatmul.mubr.f32.gmra.mxu0 %v885
      %v887 = vpop.f32.mrf.mxu0
      %v888 = vadd.f32 0.0, %v887
      %v889 = vpop.f32.mrf.mxu0
      %890 = vmatprep.mubr.f32.mxu0 0.0
      %v891 = vand.u32 %v166, 4294901760
      %v892 = vsub.f32 %v166, %v891
      %v893 = vand.u32 %v892, 4294901760
      %v894 = vsub.f32 %v892, %v893
      %v895 = vand.u32 %v894, 4294901760
      %896 = vmatmul.mubr.f32.gmra.mxu0 %v895
      %v897 = vpop.f32.mrf.mxu0
      %v898 = vadd.f32 0.0, %v897
      %v899 = vpop.f32.mrf.mxu0
      %900 = vdwg.mxu0
      %901 = vmatprep.subr.mxu0 0.0
      %902 = vmatpush1.msra.mxu0 0.0
      %903 = vmatprep.subr.mxu0 0.0
      %904 = vmatpush1.msra.mxu0 0.0
      %905 = vmatprep.subr.mxu0 0.0
      %906 = vmatpush1.msra.mxu0 0.0
      %907 = vmatprep.subr.mxu0 0.0
      %908 = vmatpush1.msra.mxu0 0.0
      %909 = vmatprep.subr.mxu0 0.0
      %910 = vmatpush1.msra.mxu0 0.0
      %911 = vmatprep.subr.mxu0 0.0
      %912 = vmatpush1.msra.mxu0 0.0
      %913 = vmatprep.subr.mxu0 0.0
      %914 = vmatpush1.msra.mxu0 0.0
      %915 = vmatprep.subr.mxu0 0.0
      %916 = vmatpush1.msra.mxu0 0.0
      %917 = vmatprep.subr.mxu0 0.0
      %918 = vmatpush1.msra.mxu0 0.0
      %919 = vmatprep.subr.mxu0 0.0
      %920 = vmatpush1.msra.mxu0 0.0
      %921 = vmatprep.subr.mxu0 0.0
      %922 = vmatpush1.msra.mxu0 0.0
      %923 = vmatprep.subr.mxu0 0.0
      %924 = vmatpush1.msra.mxu0 0.0
      %925 = vmatprep.subr.mxu0 0.0
      %v926 = vand.u32 %v791, 4294901760
      %v927 = vsub.f32 %v791, %v926
      %v928 = vand.u32 %v927, 4294901760
      %v929 = vsub.f32 %v927, %v928
      %v930 = vand.u32 %v929, 4294901760
      %931 = vmatpush1.msra.mxu0 %v930
      %932 = vmatprep.subr.mxu0 0.0
      %v933 = vand.u32 %v790, 4294901760
      %v934 = vsub.f32 %v790, %v933
      %v935 = vand.u32 %v934, 4294901760
      %v936 = vsub.f32 %v934, %v935
      %v937 = vand.u32 %v936, 4294901760
      %938 = vmatpush1.msra.mxu0 %v937
      %939 = vmatprep.subr.mxu0 0.0
      %v940 = vand.u32 %v789, 4294901760
      %v941 = vsub.f32 %v789, %v940
      %v942 = vand.u32 %v941, 4294901760
      %v943 = vsub.f32 %v941, %v942
      %v944 = vand.u32 %v943, 4294901760
      %945 = vmatpush1.msra.mxu0 %v944
      %946 = vmatprep.subr.mxu0 0.0
      %v947 = vand.u32 %v788, 4294901760
      %v948 = vsub.f32 %v788, %v947
      %v949 = vand.u32 %v948, 4294901760
      %v950 = vsub.f32 %v948, %v949
      %v951 = vand.u32 %v950, 4294901760
      %952 = vmatpush1.msra.mxu0 %v951
      %953 = vmatprep.subr.mxu0 0.0
      %954 = vmatpush2.msra.mxu0 0.0
      %955 = vmatprep.subr.mxu0 0.0
      %956 = vmatpush2.msra.mxu0 0.0
      %957 = vmatprep.subr.mxu0 0.0
      %958 = vmatpush2.msra.mxu0 0.0
      %959 = vmatprep.subr.mxu0 0.0
      %960 = vmatpush2.msra.mxu0 0.0
      %961 = vmatprep.subr.mxu0 0.0
      %962 = vmatpush2.msra.mxu0 0.0
      %963 = vmatprep.subr.mxu0 0.0
      %964 = vmatpush2.msra.mxu0 0.0
      %965 = vmatprep.subr.mxu0 0.0
      %966 = vmatpush2.msra.mxu0 0.0
      %967 = vmatprep.subr.mxu0 0.0
      %968 = vmatpush2.msra.mxu0 0.0
      %969 = vmatprep.subr.mxu0 0.0
      %970 = vmatpush2.msra.mxu0 0.0
      %971 = vmatprep.subr.mxu0 0.0
      %972 = vmatpush2.msra.mxu0 0.0
      %973 = vmatprep.subr.mxu0 0.0
      %974 = vmatpush2.msra.mxu0 0.0
      %975 = vmatprep.subr.mxu0 0.0
      %976 = vmatpush2.msra.mxu0 0.0
      %977 = vmatprep.subr.mxu0 0.0
      %978 = vmatpush2.msra.mxu0 0.0
      %979 = vmatprep.subr.mxu0 0.0
      %980 = vmatpush2.msra.mxu0 0.0
      %981 = vmatprep.subr.mxu0 0.0
      %982 = vmatpush2.msra.mxu0 0.0
      %983 = vmatprep.subr.mxu0 0.0
      %984 = vmatpush2.msra.mxu0 0.0
      %985 = vmatprep.mubr.f32.mxu0 0.0
      %v986 = vand.u32 %v157, 4294901760
      %987 = vmatmul.mubr.f32.gmra.mxu0 %v986
      %v988 = vpop.f32.mrf.mxu0
      %v989 = vadd.f32 %v868, %v988
      %v990 = vpop.f32.mrf.mxu0
      %991 = vmatprep.mubr.f32.mxu0 0.0
      %v992 = vand.u32 %v160, 4294901760
      %993 = vmatmul.mubr.f32.gmra.mxu0 %v992
      %v994 = vpop.f32.mrf.mxu0
      %v995 = vadd.f32 %v878, %v994
      %v996 = vpop.f32.mrf.mxu0
      %997 = vmatprep.mubr.f32.mxu0 0.0
      %v998 = vand.u32 %v163, 4294901760
      %999 = vmatmul.mubr.f32.gmra.mxu0 %v998
      %v1000 = vpop.f32.mrf.mxu0
      %v1001 = vadd.f32 %v888, %v1000
      %v1002 = vpop.f32.mrf.mxu0
      %1003 = vmatprep.mubr.f32.mxu0 0.0
      %v1004 = vand.u32 %v166, 4294901760
      %1005 = vmatmul.mubr.f32.gmra.mxu0 %v1004
      %v1006 = vpop.f32.mrf.mxu0
      %v1007 = vadd.f32 %v898, %v1006
      %v1008 = vpop.f32.mrf.mxu0
      %1009 = vdwg.mxu0
      %1010 = vmatprep.subr.mxu0 0.0
      %1011 = vmatpush1.msra.mxu0 0.0
      %1012 = vmatprep.subr.mxu0 0.0
      %1013 = vmatpush1.msra.mxu0 0.0
      %1014 = vmatprep.subr.mxu0 0.0
      %1015 = vmatpush1.msra.mxu0 0.0
      %1016 = vmatprep.subr.mxu0 0.0
      %1017 = vmatpush1.msra.mxu0 0.0
      %1018 = vmatprep.subr.mxu0 0.0
      %1019 = vmatpush1.msra.mxu0 0.0
      %1020 = vmatprep.subr.mxu0 0.0
      %1021 = vmatpush1.msra.mxu0 0.0
      %1022 = vmatprep.subr.mxu0 0.0
      %1023 = vmatpush1.msra.mxu0 0.0
      %1024 = vmatprep.subr.mxu0 0.0
      %1025 = vmatpush1.msra.mxu0 0.0
      %1026 = vmatprep.subr.mxu0 0.0
      %1027 = vmatpush1.msra.mxu0 0.0
      %1028 = vmatprep.subr.mxu0 0.0
      %1029 = vmatpush1.msra.mxu0 0.0
      %1030 = vmatprep.subr.mxu0 0.0
      %1031 = vmatpush1.msra.mxu0 0.0
      %1032 = vmatprep.subr.mxu0 0.0
      %1033 = vmatpush1.msra.mxu0 0.0
      %1034 = vmatprep.subr.mxu0 0.0
      %v1035 = vand.u32 %v791, 4294901760
      %v1036 = vsub.f32 %v791, %v1035
      %1037 = vmatpush1.msra.mxu0 %v1036
      %1038 = vmatprep.subr.mxu0 0.0
      %v1039 = vand.u32 %v790, 4294901760
      %v1040 = vsub.f32 %v790, %v1039
      %1041 = vmatpush1.msra.mxu0 %v1040
      %1042 = vmatprep.subr.mxu0 0.0
      %v1043 = vand.u32 %v789, 4294901760
      %v1044 = vsub.f32 %v789, %v1043
      %1045 = vmatpush1.msra.mxu0 %v1044
      %1046 = vmatprep.subr.mxu0 0.0
      %v1047 = vand.u32 %v788, 4294901760
      %v1048 = vsub.f32 %v788, %v1047
      %1049 = vmatpush1.msra.mxu0 %v1048
      %1050 = vmatprep.subr.mxu0 0.0
      %1051 = vmatpush2.msra.mxu0 0.0
      %1052 = vmatprep.subr.mxu0 0.0
      %1053 = vmatpush2.msra.mxu0 0.0
      %1054 = vmatprep.subr.mxu0 0.0
      %1055 = vmatpush2.msra.mxu0 0.0
      %1056 = vmatprep.subr.mxu0 0.0
      %1057 = vmatpush2.msra.mxu0 0.0
      %1058 = vmatprep.subr.mxu0 0.0
      %1059 = vmatpush2.msra.mxu0 0.0
      %1060 = vmatprep.subr.mxu0 0.0
      %1061 = vmatpush2.msra.mxu0 0.0
      %1062 = vmatprep.subr.mxu0 0.0
      %1063 = vmatpush2.msra.mxu0 0.0
      %1064 = vmatprep.subr.mxu0 0.0
      %1065 = vmatpush2.msra.mxu0 0.0
      %1066 = vmatprep.subr.mxu0 0.0
      %1067 = vmatpush2.msra.mxu0 0.0
      %1068 = vmatprep.subr.mxu0 0.0
      %1069 = vmatpush2.msra.mxu0 0.0
      %1070 = vmatprep.subr.mxu0 0.0
      %1071 = vmatpush2.msra.mxu0 0.0
      %1072 = vmatprep.subr.mxu0 0.0
      %1073 = vmatpush2.msra.mxu0 0.0
      %1074 = vmatprep.subr.mxu0 0.0
      %1075 = vmatpush2.msra.mxu0 0.0
      %1076 = vmatprep.subr.mxu0 0.0
      %1077 = vmatpush2.msra.mxu0 0.0
      %1078 = vmatprep.subr.mxu0 0.0
      %1079 = vmatpush2.msra.mxu0 0.0
      %1080 = vmatprep.subr.mxu0 0.0
      %1081 = vmatpush2.msra.mxu0 0.0
      %1082 = vmatprep.mubr.f32.mxu0 0.0
      %v1083 = vand.u32 %v157, 4294901760
      %v1084 = vsub.f32 %v157, %v1083
      %1085 = vmatmul.mubr.f32.gmra.mxu0 %v1084
      %v1086 = vpop.f32.mrf.mxu0
      %v1087 = vadd.f32 %v989, %v1086
      %v1088 = vpop.f32.mrf.mxu0
      %1089 = vmatprep.mubr.f32.mxu0 0.0
      %v1090 = vand.u32 %v160, 4294901760
      %v1091 = vsub.f32 %v160, %v1090
      %1092 = vmatmul.mubr.f32.gmra.mxu0 %v1091
      %v1093 = vpop.f32.mrf.mxu0
      %v1094 = vadd.f32 %v995, %v1093
      %v1095 = vpop.f32.mrf.mxu0
      %1096 = vmatprep.mubr.f32.mxu0 0.0
      %v1097 = vand.u32 %v163, 4294901760
      %v1098 = vsub.f32 %v163, %v1097
      %1099 = vmatmul.mubr.f32.gmra.mxu0 %v1098
      %v1100 = vpop.f32.mrf.mxu0
      %v1101 = vadd.f32 %v1001, %v1100
      %v1102 = vpop.f32.mrf.mxu0
      %1103 = vmatprep.mubr.f32.mxu0 0.0
      %v1104 = vand.u32 %v166, 4294901760
      %v1105 = vsub.f32 %v166, %v1104
      %1106 = vmatmul.mubr.f32.gmra.mxu0 %v1105
      %v1107 = vpop.f32.mrf.mxu0
      %v1108 = vadd.f32 %v1007, %v1107
      %v1109 = vpop.f32.mrf.mxu0
      %1110 = vdwg.mxu0
      %1111 = vmatprep.subr.mxu0 0.0
      %1112 = vmatpush1.msra.mxu0 0.0
      %1113 = vmatprep.subr.mxu0 0.0
      %1114 = vmatpush1.msra.mxu0 0.0
      %1115 = vmatprep.subr.mxu0 0.0
      %1116 = vmatpush1.msra.mxu0 0.0
      %1117 = vmatprep.subr.mxu0 0.0
      %1118 = vmatpush1.msra.mxu0 0.0
      %1119 = vmatprep.subr.mxu0 0.0
      %1120 = vmatpush1.msra.mxu0 0.0
      %1121 = vmatprep.subr.mxu0 0.0
      %1122 = vmatpush1.msra.mxu0 0.0
      %1123 = vmatprep.subr.mxu0 0.0
      %1124 = vmatpush1.msra.mxu0 0.0
      %1125 = vmatprep.subr.mxu0 0.0
      %1126 = vmatpush1.msra.mxu0 0.0
      %1127 = vmatprep.subr.mxu0 0.0
      %1128 = vmatpush1.msra.mxu0 0.0
      %1129 = vmatprep.subr.mxu0 0.0
      %1130 = vmatpush1.msra.mxu0 0.0
      %1131 = vmatprep.subr.mxu0 0.0
      %1132 = vmatpush1.msra.mxu0 0.0
      %1133 = vmatprep.subr.mxu0 0.0
      %1134 = vmatpush1.msra.mxu0 0.0
      %1135 = vmatprep.subr.mxu0 0.0
      %v1136 = vand.u32 %v791, 4294901760
      %1137 = vmatpush1.msra.mxu0 %v1136
      %1138 = vmatprep.subr.mxu0 0.0
      %v1139 = vand.u32 %v790, 4294901760
      %1140 = vmatpush1.msra.mxu0 %v1139
      %1141 = vmatprep.subr.mxu0 0.0
      %v1142 = vand.u32 %v789, 4294901760
      %1143 = vmatpush1.msra.mxu0 %v1142
      %1144 = vmatprep.subr.mxu0 0.0
      %v1145 = vand.u32 %v788, 4294901760
      %1146 = vmatpush1.msra.mxu0 %v1145
      %1147 = vmatprep.subr.mxu0 0.0
      %1148 = vmatpush2.msra.mxu0 0.0
      %1149 = vmatprep.subr.mxu0 0.0
      %1150 = vmatpush2.msra.mxu0 0.0
      %1151 = vmatprep.subr.mxu0 0.0
      %1152 = vmatpush2.msra.mxu0 0.0
      %1153 = vmatprep.subr.mxu0 0.0
      %1154 = vmatpush2.msra.mxu0 0.0
      %1155 = vmatprep.subr.mxu0 0.0
      %1156 = vmatpush2.msra.mxu0 0.0
      %1157 = vmatprep.subr.mxu0 0.0
      %1158 = vmatpush2.msra.mxu0 0.0
      %1159 = vmatprep.subr.mxu0 0.0
      %1160 = vmatpush2.msra.mxu0 0.0
      %1161 = vmatprep.subr.mxu0 0.0
      %1162 = vmatpush2.msra.mxu0 0.0
      %1163 = vmatprep.subr.mxu0 0.0
      %1164 = vmatpush2.msra.mxu0 0.0
      %1165 = vmatprep.subr.mxu0 0.0
      %1166 = vmatpush2.msra.mxu0 0.0
      %1167 = vmatprep.subr.mxu0 0.0
      %1168 = vmatpush2.msra.mxu0 0.0
      %1169 = vmatprep.subr.mxu0 0.0
      %1170 = vmatpush2.msra.mxu0 0.0
      %1171 = vmatprep.subr.mxu0 0.0
      %1172 = vmatpush2.msra.mxu0 0.0
      %1173 = vmatprep.subr.mxu0 0.0
      %1174 = vmatpush2.msra.mxu0 0.0
      %1175 = vmatprep.subr.mxu0 0.0
      %1176 = vmatpush2.msra.mxu0 0.0
      %1177 = vmatprep.subr.mxu0 0.0
      %1178 = vmatpush2.msra.mxu0 0.0
      %1179 = vmatprep.mubr.f32.mxu0 0.0
      %v1180 = vand.u32 %v157, 4294901760
      %v1181 = vsub.f32 %v157, %v1180
      %v1182 = vand.u32 %v1181, 4294901760
      %1183 = vmatmul.mubr.f32.gmra.mxu0 %v1182
      %v1184 = vpop.f32.mrf.mxu0
      %v1185 = vadd.f32 %v1087, %v1184
      %v1186 = vpop.f32.mrf.mxu0
      %1187 = vmatprep.mubr.f32.mxu0 0.0
      %v1188 = vand.u32 %v160, 4294901760
      %v1189 = vsub.f32 %v160, %v1188
      %v1190 = vand.u32 %v1189, 4294901760
      %1191 = vmatmul.mubr.f32.gmra.mxu0 %v1190
      %v1192 = vpop.f32.mrf.mxu0
      %v1193 = vadd.f32 %v1094, %v1192
      %v1194 = vpop.f32.mrf.mxu0
      %1195 = vmatprep.mubr.f32.mxu0 0.0
      %v1196 = vand.u32 %v163, 4294901760
      %v1197 = vsub.f32 %v163, %v1196
      %v1198 = vand.u32 %v1197, 4294901760
      %1199 = vmatmul.mubr.f32.gmra.mxu0 %v1198
      %v1200 = vpop.f32.mrf.mxu0
      %v1201 = vadd.f32 %v1101, %v1200
      %v1202 = vpop.f32.mrf.mxu0
      %1203 = vmatprep.mubr.f32.mxu0 0.0
      %v1204 = vand.u32 %v166, 4294901760
      %v1205 = vsub.f32 %v166, %v1204
      %v1206 = vand.u32 %v1205, 4294901760
      %1207 = vmatmul.mubr.f32.gmra.mxu0 %v1206
      %v1208 = vpop.f32.mrf.mxu0
      %v1209 = vadd.f32 %v1108, %v1208
      %v1210 = vpop.f32.mrf.mxu0
      %1211 = vdwg.mxu0
      %1212 = vmatprep.subr.mxu0 0.0
      %1213 = vmatpush1.msra.mxu0 0.0
      %1214 = vmatprep.subr.mxu0 0.0
      %1215 = vmatpush1.msra.mxu0 0.0
      %1216 = vmatprep.subr.mxu0 0.0
      %1217 = vmatpush1.msra.mxu0 0.0
      %1218 = vmatprep.subr.mxu0 0.0
      %1219 = vmatpush1.msra.mxu0 0.0
      %1220 = vmatprep.subr.mxu0 0.0
      %1221 = vmatpush1.msra.mxu0 0.0
      %1222 = vmatprep.subr.mxu0 0.0
      %1223 = vmatpush1.msra.mxu0 0.0
      %1224 = vmatprep.subr.mxu0 0.0
      %1225 = vmatpush1.msra.mxu0 0.0
      %1226 = vmatprep.subr.mxu0 0.0
      %1227 = vmatpush1.msra.mxu0 0.0
      %1228 = vmatprep.subr.mxu0 0.0
      %1229 = vmatpush1.msra.mxu0 0.0
      %1230 = vmatprep.subr.mxu0 0.0
      %1231 = vmatpush1.msra.mxu0 0.0
      %1232 = vmatprep.subr.mxu0 0.0
      %1233 = vmatpush1.msra.mxu0 0.0
      %1234 = vmatprep.subr.mxu0 0.0
      %1235 = vmatpush1.msra.mxu0 0.0
      %1236 = vmatprep.subr.mxu0 0.0
      %v1237 = vand.u32 %v791, 4294901760
      %v1238 = vsub.f32 %v791, %v1237
      %v1239 = vand.u32 %v1238, 4294901760
      %1240 = vmatpush1.msra.mxu0 %v1239
      %1241 = vmatprep.subr.mxu0 0.0
      %v1242 = vand.u32 %v790, 4294901760
      %v1243 = vsub.f32 %v790, %v1242
      %v1244 = vand.u32 %v1243, 4294901760
      %1245 = vmatpush1.msra.mxu0 %v1244
      %1246 = vmatprep.subr.mxu0 0.0
      %v1247 = vand.u32 %v789, 4294901760
      %v1248 = vsub.f32 %v789, %v1247
      %v1249 = vand.u32 %v1248, 4294901760
      %1250 = vmatpush1.msra.mxu0 %v1249
      %1251 = vmatprep.subr.mxu0 0.0
      %v1252 = vand.u32 %v788, 4294901760
      %v1253 = vsub.f32 %v788, %v1252
      %v1254 = vand.u32 %v1253, 4294901760
      %1255 = vmatpush1.msra.mxu0 %v1254
      %1256 = vmatprep.subr.mxu0 0.0
      %1257 = vmatpush2.msra.mxu0 0.0
      %1258 = vmatprep.subr.mxu0 0.0
      %1259 = vmatpush2.msra.mxu0 0.0
      %1260 = vmatprep.subr.mxu0 0.0
      %1261 = vmatpush2.msra.mxu0 0.0
      %1262 = vmatprep.subr.mxu0 0.0
      %1263 = vmatpush2.msra.mxu0 0.0
      %1264 = vmatprep.subr.mxu0 0.0
      %1265 = vmatpush2.msra.mxu0 0.0
      %1266 = vmatprep.subr.mxu0 0.0
      %1267 = vmatpush2.msra.mxu0 0.0
      %1268 = vmatprep.subr.mxu0 0.0
      %1269 = vmatpush2.msra.mxu0 0.0
      %1270 = vmatprep.subr.mxu0 0.0
      %1271 = vmatpush2.msra.mxu0 0.0
      %1272 = vmatprep.subr.mxu0 0.0
      %1273 = vmatpush2.msra.mxu0 0.0
      %1274 = vmatprep.subr.mxu0 0.0
      %1275 = vmatpush2.msra.mxu0 0.0
      %1276 = vmatprep.subr.mxu0 0.0
      %1277 = vmatpush2.msra.mxu0 0.0
      %1278 = vmatprep.subr.mxu0 0.0
      %1279 = vmatpush2.msra.mxu0 0.0
      %1280 = vmatprep.subr.mxu0 0.0
      %1281 = vmatpush2.msra.mxu0 0.0
      %1282 = vmatprep.subr.mxu0 0.0
      %1283 = vmatpush2.msra.mxu0 0.0
      %1284 = vmatprep.subr.mxu0 0.0
      %1285 = vmatpush2.msra.mxu0 0.0
      %1286 = vmatprep.subr.mxu0 0.0
      %1287 = vmatpush2.msra.mxu0 0.0
      %1288 = vmatprep.mubr.f32.mxu0 0.0
      %v1289 = vand.u32 %v157, 4294901760
      %1290 = vmatmul.mubr.f32.gmra.mxu0 %v1289
      %v1291 = vpop.f32.mrf.mxu0
      %v1292 = vadd.f32 %v1185, %v1291
      %v1293 = vpop.f32.mrf.mxu0
      %1294 = vmatprep.mubr.f32.mxu0 0.0
      %v1295 = vand.u32 %v160, 4294901760
      %1296 = vmatmul.mubr.f32.gmra.mxu0 %v1295
      %v1297 = vpop.f32.mrf.mxu0
      %v1298 = vadd.f32 %v1193, %v1297
      %v1299 = vpop.f32.mrf.mxu0
      %1300 = vmatprep.mubr.f32.mxu0 0.0
      %v1301 = vand.u32 %v163, 4294901760
      %1302 = vmatmul.mubr.f32.gmra.mxu0 %v1301
      %v1303 = vpop.f32.mrf.mxu0
      %v1304 = vadd.f32 %v1201, %v1303
      %v1305 = vpop.f32.mrf.mxu0
      %1306 = vmatprep.mubr.f32.mxu0 0.0
      %v1307 = vand.u32 %v166, 4294901760
      %1308 = vmatmul.mubr.f32.gmra.mxu0 %v1307
      %v1309 = vpop.f32.mrf.mxu0
      %v1310 = vadd.f32 %v1209, %v1309
      %v1311 = vpop.f32.mrf.mxu0
      %1312 = vdwg.mxu0
      %1313 = vmatprep.subr.mxu0 0.0
      %1314 = vmatpush1.msra.mxu0 0.0
      %1315 = vmatprep.subr.mxu0 0.0
      %1316 = vmatpush1.msra.mxu0 0.0
      %1317 = vmatprep.subr.mxu0 0.0
      %1318 = vmatpush1.msra.mxu0 0.0
      %1319 = vmatprep.subr.mxu0 0.0
      %1320 = vmatpush1.msra.mxu0 0.0
      %1321 = vmatprep.subr.mxu0 0.0
      %1322 = vmatpush1.msra.mxu0 0.0
      %1323 = vmatprep.subr.mxu0 0.0
      %1324 = vmatpush1.msra.mxu0 0.0
      %1325 = vmatprep.subr.mxu0 0.0
      %1326 = vmatpush1.msra.mxu0 0.0
      %1327 = vmatprep.subr.mxu0 0.0
      %1328 = vmatpush1.msra.mxu0 0.0
      %1329 = vmatprep.subr.mxu0 0.0
      %1330 = vmatpush1.msra.mxu0 0.0
      %1331 = vmatprep.subr.mxu0 0.0
      %1332 = vmatpush1.msra.mxu0 0.0
      %1333 = vmatprep.subr.mxu0 0.0
      %1334 = vmatpush1.msra.mxu0 0.0
      %1335 = vmatprep.subr.mxu0 0.0
      %1336 = vmatpush1.msra.mxu0 0.0
      %1337 = vmatprep.subr.mxu0 0.0
      %v1338 = vand.u32 %v791, 4294901760
      %1339 = vmatpush1.msra.mxu0 %v1338
      %1340 = vmatprep.subr.mxu0 0.0
      %v1341 = vand.u32 %v790, 4294901760
      %1342 = vmatpush1.msra.mxu0 %v1341
      %1343 = vmatprep.subr.mxu0 0.0
      %v1344 = vand.u32 %v789, 4294901760
      %1345 = vmatpush1.msra.mxu0 %v1344
      %1346 = vmatprep.subr.mxu0 0.0
      %v1347 = vand.u32 %v788, 4294901760
      %1348 = vmatpush1.msra.mxu0 %v1347
      %1349 = vmatprep.subr.mxu0 0.0
      %1350 = vmatpush2.msra.mxu0 0.0
      %1351 = vmatprep.subr.mxu0 0.0
      %1352 = vmatpush2.msra.mxu0 0.0
      %1353 = vmatprep.subr.mxu0 0.0
      %1354 = vmatpush2.msra.mxu0 0.0
      %1355 = vmatprep.subr.mxu0 0.0
      %1356 = vmatpush2.msra.mxu0 0.0
      %1357 = vmatprep.subr.mxu0 0.0
      %1358 = vmatpush2.msra.mxu0 0.0
      %1359 = vmatprep.subr.mxu0 0.0
      %1360 = vmatpush2.msra.mxu0 0.0
      %1361 = vmatprep.subr.mxu0 0.0
      %1362 = vmatpush2.msra.mxu0 0.0
      %1363 = vmatprep.subr.mxu0 0.0
      %1364 = vmatpush2.msra.mxu0 0.0
      %1365 = vmatprep.subr.mxu0 0.0
      %1366 = vmatpush2.msra.mxu0 0.0
      %1367 = vmatprep.subr.mxu0 0.0
      %1368 = vmatpush2.msra.mxu0 0.0
      %1369 = vmatprep.subr.mxu0 0.0
      %1370 = vmatpush2.msra.mxu0 0.0
      %1371 = vmatprep.subr.mxu0 0.0
      %1372 = vmatpush2.msra.mxu0 0.0
      %1373 = vmatprep.subr.mxu0 0.0
      %1374 = vmatpush2.msra.mxu0 0.0
      %1375 = vmatprep.subr.mxu0 0.0
      %1376 = vmatpush2.msra.mxu0 0.0
      %1377 = vmatprep.subr.mxu0 0.0
      %1378 = vmatpush2.msra.mxu0 0.0
      %1379 = vmatprep.subr.mxu0 0.0
      %1380 = vmatpush2.msra.mxu0 0.0
      %1381 = vmatprep.mubr.f32.mxu0 0.0
      %v1382 = vand.u32 %v157, 4294901760
      %1383 = vmatmul.mubr.f32.gmra.mxu0 %v1382
      %v1384 = vpop.f32.mrf.mxu0
      %v1385 = vadd.f32 %v1292, %v1384
      %v1386 = vpop.f32.mrf.mxu0
      %1387 = vmatprep.mubr.f32.mxu0 0.0
      %v1388 = vand.u32 %v160, 4294901760
      %1389 = vmatmul.mubr.f32.gmra.mxu0 %v1388
      %v1390 = vpop.f32.mrf.mxu0
      %v1391 = vadd.f32 %v1298, %v1390
      %v1392 = vpop.f32.mrf.mxu0
      %1393 = vmatprep.mubr.f32.mxu0 0.0
      %v1394 = vand.u32 %v163, 4294901760
      %1395 = vmatmul.mubr.f32.gmra.mxu0 %v1394
      %v1396 = vpop.f32.mrf.mxu0
      %v1397 = vadd.f32 %v1304, %v1396
      %v1398 = vpop.f32.mrf.mxu0
      %1399 = vmatprep.mubr.f32.mxu0 0.0
      %v1400 = vand.u32 %v166, 4294901760
      %1401 = vmatmul.mubr.f32.gmra.mxu0 %v1400
      %v1402 = vpop.f32.mrf.mxu0
      %v1403 = vadd.f32 %v1310, %v1402
      %v1404 = vpop.f32.mrf.mxu0
      %1405 = vdwg.mxu0
      %1406 = vst.msk [vmem:[%s145 + $0x8] sm:$0xff] %vm782, %v1385
      %1407 = vst.msk [vmem:[%s145 + $0x28] sm:$0xff] %vm782, %v1391
      %1408 = vst.msk [vmem:[%s145 + $0x48] sm:$0xff] %vm782, %v1397
      %1409 = vst.msk [vmem:[%s145 + $0x68] sm:$0xff] %vm782, %v1403
      %s1410 = scalar_lea.vmem %s0, 64
      %v1411 = vld [vmem:[%s1410] sm:$0xff]
      %v1412 = vld [vmem:[%s1410 + $0x8] sm:$0xff]
      %v1413 = vld [vmem:[%s1410 + $0x10] sm:$0xff]
      %v1414 = vld [vmem:[%s1410 + $0x18] sm:$0xff]
      %1415 = vmatprep.subr.mxu0 0.0
      %1416 = vmatpush1.msra.mxu0 0.0
      %1417 = vmatprep.subr.mxu0 0.0
      %1418 = vmatpush1.msra.mxu0 0.0
      %1419 = vmatprep.subr.mxu0 0.0
      %1420 = vmatpush1.msra.mxu0 0.0
      %1421 = vmatprep.subr.mxu0 0.0
      %1422 = vmatpush1.msra.mxu0 0.0
      %1423 = vmatprep.subr.mxu0 0.0
      %1424 = vmatpush1.msra.mxu0 0.0
      %1425 = vmatprep.subr.mxu0 0.0
      %1426 = vmatpush1.msra.mxu0 0.0
      %1427 = vmatprep.subr.mxu0 0.0
      %1428 = vmatpush1.msra.mxu0 0.0
      %1429 = vmatprep.subr.mxu0 0.0
      %1430 = vmatpush1.msra.mxu0 0.0
      %1431 = vmatprep.subr.mxu0 0.0
      %1432 = vmatpush1.msra.mxu0 0.0
      %1433 = vmatprep.subr.mxu0 0.0
      %1434 = vmatpush1.msra.mxu0 0.0
      %1435 = vmatprep.subr.mxu0 0.0
      %1436 = vmatpush1.msra.mxu0 0.0
      %1437 = vmatprep.subr.mxu0 0.0
      %1438 = vmatpush1.msra.mxu0 0.0
      %1439 = vmatprep.subr.mxu0 0.0
      %v1440 = vand.u32 %v1414, 4294901760
      %1441 = vmatpush1.msra.mxu0 %v1440
      %1442 = vmatprep.subr.mxu0 0.0
      %v1443 = vand.u32 %v1413, 4294901760
      %1444 = vmatpush1.msra.mxu0 %v1443
      %1445 = vmatprep.subr.mxu0 0.0
      %v1446 = vand.u32 %v1412, 4294901760
      %1447 = vmatpush1.msra.mxu0 %v1446
      %1448 = vmatprep.subr.mxu0 0.0
      %v1449 = vand.u32 %v1411, 4294901760
      %1450 = vmatpush1.msra.mxu0 %v1449
      %1451 = vmatprep.subr.mxu0 0.0
      %1452 = vmatpush2.msra.mxu0 0.0
      %1453 = vmatprep.subr.mxu0 0.0
      %1454 = vmatpush2.msra.mxu0 0.0
      %1455 = vmatprep.subr.mxu0 0.0
      %1456 = vmatpush2.msra.mxu0 0.0
      %1457 = vmatprep.subr.mxu0 0.0
      %1458 = vmatpush2.msra.mxu0 0.0
      %1459 = vmatprep.subr.mxu0 0.0
      %1460 = vmatpush2.msra.mxu0 0.0
      %1461 = vmatprep.subr.mxu0 0.0
      %1462 = vmatpush2.msra.mxu0 0.0
      %1463 = vmatprep.subr.mxu0 0.0
      %1464 = vmatpush2.msra.mxu0 0.0
      %1465 = vmatprep.subr.mxu0 0.0
      %1466 = vmatpush2.msra.mxu0 0.0
      %1467 = vmatprep.subr.mxu0 0.0
      %1468 = vmatpush2.msra.mxu0 0.0
      %1469 = vmatprep.subr.mxu0 0.0
      %1470 = vmatpush2.msra.mxu0 0.0
      %1471 = vmatprep.subr.mxu0 0.0
      %1472 = vmatpush2.msra.mxu0 0.0
      %1473 = vmatprep.subr.mxu0 0.0
      %1474 = vmatpush2.msra.mxu0 0.0
      %1475 = vmatprep.subr.mxu0 0.0
      %1476 = vmatpush2.msra.mxu0 0.0
      %1477 = vmatprep.subr.mxu0 0.0
      %1478 = vmatpush2.msra.mxu0 0.0
      %1479 = vmatprep.subr.mxu0 0.0
      %1480 = vmatpush2.msra.mxu0 0.0
      %1481 = vmatprep.subr.mxu0 0.0
      %1482 = vmatpush2.msra.mxu0 0.0
      %1483 = vmatprep.mubr.f32.mxu0 0.0
      %v1484 = vand.u32 %v157, 4294901760
      %v1485 = vsub.f32 %v157, %v1484
      %v1486 = vand.u32 %v1485, 4294901760
      %v1487 = vsub.f32 %v1485, %v1486
      %v1488 = vand.u32 %v1487, 4294901760
      %1489 = vmatmul.mubr.f32.gmra.mxu0 %v1488
      %v1490 = vpop.f32.mrf.mxu0
      %v1491 = vadd.f32 0.0, %v1490
      %v1492 = vpop.f32.mrf.mxu0
      %1493 = vmatprep.mubr.f32.mxu0 0.0
      %v1494 = vand.u32 %v160, 4294901760
      %v1495 = vsub.f32 %v160, %v1494
      %v1496 = vand.u32 %v1495, 4294901760
      %v1497 = vsub.f32 %v1495, %v1496
      %v1498 = vand.u32 %v1497, 4294901760
      %1499 = vmatmul.mubr.f32.gmra.mxu0 %v1498
      %v1500 = vpop.f32.mrf.mxu0
      %v1501 = vadd.f32 0.0, %v1500
      %v1502 = vpop.f32.mrf.mxu0
      %1503 = vmatprep.mubr.f32.mxu0 0.0
      %v1504 = vand.u32 %v163, 4294901760
      %v1505 = vsub.f32 %v163, %v1504
      %v1506 = vand.u32 %v1505, 4294901760
      %v1507 = vsub.f32 %v1505, %v1506
      %v1508 = vand.u32 %v1507, 4294901760
      %1509 = vmatmul.mubr.f32.gmra.mxu0 %v1508
      %v1510 = vpop.f32.mrf.mxu0
      %v1511 = vadd.f32 0.0, %v1510
      %v1512 = vpop.f32.mrf.mxu0
      %1513 = vmatprep.mubr.f32.mxu0 0.0
      %v1514 = vand.u32 %v166, 4294901760
      %v1515 = vsub.f32 %v166, %v1514
      %v1516 = vand.u32 %v1515, 4294901760
      %v1517 = vsub.f32 %v1515, %v1516
      %v1518 = vand.u32 %v1517, 4294901760
      %1519 = vmatmul.mubr.f32.gmra.mxu0 %v1518
      %v1520 = vpop.f32.mrf.mxu0
      %v1521 = vadd.f32 0.0, %v1520
      %v1522 = vpop.f32.mrf.mxu0
      %1523 = vdwg.mxu0
      %1524 = vmatprep.subr.mxu0 0.0
      %1525 = vmatpush1.msra.mxu0 0.0
      %1526 = vmatprep.subr.mxu0 0.0
      %1527 = vmatpush1.msra.mxu0 0.0
      %1528 = vmatprep.subr.mxu0 0.0
      %1529 = vmatpush1.msra.mxu0 0.0
      %1530 = vmatprep.subr.mxu0 0.0
      %1531 = vmatpush1.msra.mxu0 0.0
      %1532 = vmatprep.subr.mxu0 0.0
      %1533 = vmatpush1.msra.mxu0 0.0
      %1534 = vmatprep.subr.mxu0 0.0
      %1535 = vmatpush1.msra.mxu0 0.0
      %1536 = vmatprep.subr.mxu0 0.0
      %1537 = vmatpush1.msra.mxu0 0.0
      %1538 = vmatprep.subr.mxu0 0.0
      %1539 = vmatpush1.msra.mxu0 0.0
      %1540 = vmatprep.subr.mxu0 0.0
      %1541 = vmatpush1.msra.mxu0 0.0
      %1542 = vmatprep.subr.mxu0 0.0
      %1543 = vmatpush1.msra.mxu0 0.0
      %1544 = vmatprep.subr.mxu0 0.0
      %1545 = vmatpush1.msra.mxu0 0.0
      %1546 = vmatprep.subr.mxu0 0.0
      %1547 = vmatpush1.msra.mxu0 0.0
      %1548 = vmatprep.subr.mxu0 0.0
      %v1549 = vand.u32 %v1414, 4294901760
      %v1550 = vsub.f32 %v1414, %v1549
      %v1551 = vand.u32 %v1550, 4294901760
      %v1552 = vsub.f32 %v1550, %v1551
      %v1553 = vand.u32 %v1552, 4294901760
      %1554 = vmatpush1.msra.mxu0 %v1553
      %1555 = vmatprep.subr.mxu0 0.0
      %v1556 = vand.u32 %v1413, 4294901760
      %v1557 = vsub.f32 %v1413, %v1556
      %v1558 = vand.u32 %v1557, 4294901760
      %v1559 = vsub.f32 %v1557, %v1558
      %v1560 = vand.u32 %v1559, 4294901760
      %1561 = vmatpush1.msra.mxu0 %v1560
      %1562 = vmatprep.subr.mxu0 0.0
      %v1563 = vand.u32 %v1412, 4294901760
      %v1564 = vsub.f32 %v1412, %v1563
      %v1565 = vand.u32 %v1564, 4294901760
      %v1566 = vsub.f32 %v1564, %v1565
      %v1567 = vand.u32 %v1566, 4294901760
      %1568 = vmatpush1.msra.mxu0 %v1567
      %1569 = vmatprep.subr.mxu0 0.0
      %v1570 = vand.u32 %v1411, 4294901760
      %v1571 = vsub.f32 %v1411, %v1570
      %v1572 = vand.u32 %v1571, 4294901760
      %v1573 = vsub.f32 %v1571, %v1572
      %v1574 = vand.u32 %v1573, 4294901760
      %1575 = vmatpush1.msra.mxu0 %v1574
      %1576 = vmatprep.subr.mxu0 0.0
      %1577 = vmatpush2.msra.mxu0 0.0
      %1578 = vmatprep.subr.mxu0 0.0
      %1579 = vmatpush2.msra.mxu0 0.0
      %1580 = vmatprep.subr.mxu0 0.0
      %1581 = vmatpush2.msra.mxu0 0.0
      %1582 = vmatprep.subr.mxu0 0.0
      %1583 = vmatpush2.msra.mxu0 0.0
      %1584 = vmatprep.subr.mxu0 0.0
      %1585 = vmatpush2.msra.mxu0 0.0
      %1586 = vmatprep.subr.mxu0 0.0
      %1587 = vmatpush2.msra.mxu0 0.0
      %1588 = vmatprep.subr.mxu0 0.0
      %1589 = vmatpush2.msra.mxu0 0.0
      %1590 = vmatprep.subr.mxu0 0.0
      %1591 = vmatpush2.msra.mxu0 0.0
      %1592 = vmatprep.subr.mxu0 0.0
      %1593 = vmatpush2.msra.mxu0 0.0
      %1594 = vmatprep.subr.mxu0 0.0
      %1595 = vmatpush2.msra.mxu0 0.0
      %1596 = vmatprep.subr.mxu0 0.0
      %1597 = vmatpush2.msra.mxu0 0.0
      %1598 = vmatprep.subr.mxu0 0.0
      %1599 = vmatpush2.msra.mxu0 0.0
      %1600 = vmatprep.subr.mxu0 0.0
      %1601 = vmatpush2.msra.mxu0 0.0
      %1602 = vmatprep.subr.mxu0 0.0
      %1603 = vmatpush2.msra.mxu0 0.0
      %1604 = vmatprep.subr.mxu0 0.0
      %1605 = vmatpush2.msra.mxu0 0.0
      %1606 = vmatprep.subr.mxu0 0.0
      %1607 = vmatpush2.msra.mxu0 0.0
      %1608 = vmatprep.mubr.f32.mxu0 0.0
      %v1609 = vand.u32 %v157, 4294901760
      %1610 = vmatmul.mubr.f32.gmra.mxu0 %v1609
      %v1611 = vpop.f32.mrf.mxu0
      %v1612 = vadd.f32 %v1491, %v1611
      %v1613 = vpop.f32.mrf.mxu0
      %1614 = vmatprep.mubr.f32.mxu0 0.0
      %v1615 = vand.u32 %v160, 4294901760
      %1616 = vmatmul.mubr.f32.gmra.mxu0 %v1615
      %v1617 = vpop.f32.mrf.mxu0
      %v1618 = vadd.f32 %v1501, %v1617
      %v1619 = vpop.f32.mrf.mxu0
      %1620 = vmatprep.mubr.f32.mxu0 0.0
      %v1621 = vand.u32 %v163, 4294901760
      %1622 = vmatmul.mubr.f32.gmra.mxu0 %v1621
      %v1623 = vpop.f32.mrf.mxu0
      %v1624 = vadd.f32 %v1511, %v1623
      %v1625 = vpop.f32.mrf.mxu0
      %1626 = vmatprep.mubr.f32.mxu0 0.0
      %v1627 = vand.u32 %v166, 4294901760
      %1628 = vmatmul.mubr.f32.gmra.mxu0 %v1627
      %v1629 = vpop.f32.mrf.mxu0
      %v1630 = vadd.f32 %v1521, %v1629
      %v1631 = vpop.f32.mrf.mxu0
      %1632 = vdwg.mxu0
      %1633 = vmatprep.subr.mxu0 0.0
      %1634 = vmatpush1.msra.mxu0 0.0
      %1635 = vmatprep.subr.mxu0 0.0
      %1636 = vmatpush1.msra.mxu0 0.0
      %1637 = vmatprep.subr.mxu0 0.0
      %1638 = vmatpush1.msra.mxu0 0.0
      %1639 = vmatprep.subr.mxu0 0.0
      %1640 = vmatpush1.msra.mxu0 0.0
      %1641 = vmatprep.subr.mxu0 0.0
      %1642 = vmatpush1.msra.mxu0 0.0
      %1643 = vmatprep.subr.mxu0 0.0
      %1644 = vmatpush1.msra.mxu0 0.0
      %1645 = vmatprep.subr.mxu0 0.0
      %1646 = vmatpush1.msra.mxu0 0.0
      %1647 = vmatprep.subr.mxu0 0.0
      %1648 = vmatpush1.msra.mxu0 0.0
      %1649 = vmatprep.subr.mxu0 0.0
      %1650 = vmatpush1.msra.mxu0 0.0
      %1651 = vmatprep.subr.mxu0 0.0
      %1652 = vmatpush1.msra.mxu0 0.0
      %1653 = vmatprep.subr.mxu0 0.0
      %1654 = vmatpush1.msra.mxu0 0.0
      %1655 = vmatprep.subr.mxu0 0.0
      %1656 = vmatpush1.msra.mxu0 0.0
      %1657 = vmatprep.subr.mxu0 0.0
      %v1658 = vand.u32 %v1414, 4294901760
      %v1659 = vsub.f32 %v1414, %v1658
      %1660 = vmatpush1.msra.mxu0 %v1659
      %1661 = vmatprep.subr.mxu0 0.0
      %v1662 = vand.u32 %v1413, 4294901760
      %v1663 = vsub.f32 %v1413, %v1662
      %1664 = vmatpush1.msra.mxu0 %v1663
      %1665 = vmatprep.subr.mxu0 0.0
      %v1666 = vand.u32 %v1412, 4294901760
      %v1667 = vsub.f32 %v1412, %v1666
      %1668 = vmatpush1.msra.mxu0 %v1667
      %1669 = vmatprep.subr.mxu0 0.0
      %v1670 = vand.u32 %v1411, 4294901760
      %v1671 = vsub.f32 %v1411, %v1670
      %1672 = vmatpush1.msra.mxu0 %v1671
      %1673 = vmatprep.subr.mxu0 0.0
      %1674 = vmatpush2.msra.mxu0 0.0
      %1675 = vmatprep.subr.mxu0 0.0
      %1676 = vmatpush2.msra.mxu0 0.0
      %1677 = vmatprep.subr.mxu0 0.0
      %1678 = vmatpush2.msra.mxu0 0.0
      %1679 = vmatprep.subr.mxu0 0.0
      %1680 = vmatpush2.msra.mxu0 0.0
      %1681 = vmatprep.subr.mxu0 0.0
      %1682 = vmatpush2.msra.mxu0 0.0
      %1683 = vmatprep.subr.mxu0 0.0
      %1684 = vmatpush2.msra.mxu0 0.0
      %1685 = vmatprep.subr.mxu0 0.0
      %1686 = vmatpush2.msra.mxu0 0.0
      %1687 = vmatprep.subr.mxu0 0.0
      %1688 = vmatpush2.msra.mxu0 0.0
      %1689 = vmatprep.subr.mxu0 0.0
      %1690 = vmatpush2.msra.mxu0 0.0
      %1691 = vmatprep.subr.mxu0 0.0
      %1692 = vmatpush2.msra.mxu0 0.0
      %1693 = vmatprep.subr.mxu0 0.0
      %1694 = vmatpush2.msra.mxu0 0.0
      %1695 = vmatprep.subr.mxu0 0.0
      %1696 = vmatpush2.msra.mxu0 0.0
      %1697 = vmatprep.subr.mxu0 0.0
      %1698 = vmatpush2.msra.mxu0 0.0
      %1699 = vmatprep.subr.mxu0 0.0
      %1700 = vmatpush2.msra.mxu0 0.0
      %1701 = vmatprep.subr.mxu0 0.0
      %1702 = vmatpush2.msra.mxu0 0.0
      %1703 = vmatprep.subr.mxu0 0.0
      %1704 = vmatpush2.msra.mxu0 0.0
      %1705 = vmatprep.mubr.f32.mxu0 0.0
      %v1706 = vand.u32 %v157, 4294901760
      %v1707 = vsub.f32 %v157, %v1706
      %1708 = vmatmul.mubr.f32.gmra.mxu0 %v1707
      %v1709 = vpop.f32.mrf.mxu0
      %v1710 = vadd.f32 %v1612, %v1709
      %v1711 = vpop.f32.mrf.mxu0
      %1712 = vmatprep.mubr.f32.mxu0 0.0
      %v1713 = vand.u32 %v160, 4294901760
      %v1714 = vsub.f32 %v160, %v1713
      %1715 = vmatmul.mubr.f32.gmra.mxu0 %v1714
      %v1716 = vpop.f32.mrf.mxu0
      %v1717 = vadd.f32 %v1618, %v1716
      %v1718 = vpop.f32.mrf.mxu0
      %1719 = vmatprep.mubr.f32.mxu0 0.0
      %v1720 = vand.u32 %v163, 4294901760
      %v1721 = vsub.f32 %v163, %v1720
      %1722 = vmatmul.mubr.f32.gmra.mxu0 %v1721
      %v1723 = vpop.f32.mrf.mxu0
      %v1724 = vadd.f32 %v1624, %v1723
      %v1725 = vpop.f32.mrf.mxu0
      %1726 = vmatprep.mubr.f32.mxu0 0.0
      %v1727 = vand.u32 %v166, 4294901760
      %v1728 = vsub.f32 %v166, %v1727
      %1729 = vmatmul.mubr.f32.gmra.mxu0 %v1728
      %v1730 = vpop.f32.mrf.mxu0
      %v1731 = vadd.f32 %v1630, %v1730
      %v1732 = vpop.f32.mrf.mxu0
      %1733 = vdwg.mxu0
      %1734 = vmatprep.subr.mxu0 0.0
      %1735 = vmatpush1.msra.mxu0 0.0
      %1736 = vmatprep.subr.mxu0 0.0
      %1737 = vmatpush1.msra.mxu0 0.0
      %1738 = vmatprep.subr.mxu0 0.0
      %1739 = vmatpush1.msra.mxu0 0.0
      %1740 = vmatprep.subr.mxu0 0.0
      %1741 = vmatpush1.msra.mxu0 0.0
      %1742 = vmatprep.subr.mxu0 0.0
      %1743 = vmatpush1.msra.mxu0 0.0
      %1744 = vmatprep.subr.mxu0 0.0
      %1745 = vmatpush1.msra.mxu0 0.0
      %1746 = vmatprep.subr.mxu0 0.0
      %1747 = vmatpush1.msra.mxu0 0.0
      %1748 = vmatprep.subr.mxu0 0.0
      %1749 = vmatpush1.msra.mxu0 0.0
      %1750 = vmatprep.subr.mxu0 0.0
      %1751 = vmatpush1.msra.mxu0 0.0
      %1752 = vmatprep.subr.mxu0 0.0
      %1753 = vmatpush1.msra.mxu0 0.0
      %1754 = vmatprep.subr.mxu0 0.0
      %1755 = vmatpush1.msra.mxu0 0.0
      %1756 = vmatprep.subr.mxu0 0.0
      %1757 = vmatpush1.msra.mxu0 0.0
      %1758 = vmatprep.subr.mxu0 0.0
      %v1759 = vand.u32 %v1414, 4294901760
      %1760 = vmatpush1.msra.mxu0 %v1759
      %1761 = vmatprep.subr.mxu0 0.0
      %v1762 = vand.u32 %v1413, 4294901760
      %1763 = vmatpush1.msra.mxu0 %v1762
      %1764 = vmatprep.subr.mxu0 0.0
      %v1765 = vand.u32 %v1412, 4294901760
      %1766 = vmatpush1.msra.mxu0 %v1765
      %1767 = vmatprep.subr.mxu0 0.0
      %v1768 = vand.u32 %v1411, 4294901760
      %1769 = vmatpush1.msra.mxu0 %v1768
      %1770 = vmatprep.subr.mxu0 0.0
      %1771 = vmatpush2.msra.mxu0 0.0
      %1772 = vmatprep.subr.mxu0 0.0
      %1773 = vmatpush2.msra.mxu0 0.0
      %1774 = vmatprep.subr.mxu0 0.0
      %1775 = vmatpush2.msra.mxu0 0.0
      %1776 = vmatprep.subr.mxu0 0.0
      %1777 = vmatpush2.msra.mxu0 0.0
      %1778 = vmatprep.subr.mxu0 0.0
      %1779 = vmatpush2.msra.mxu0 0.0
      %1780 = vmatprep.subr.mxu0 0.0
      %1781 = vmatpush2.msra.mxu0 0.0
      %1782 = vmatprep.subr.mxu0 0.0
      %1783 = vmatpush2.msra.mxu0 0.0
      %1784 = vmatprep.subr.mxu0 0.0
      %1785 = vmatpush2.msra.mxu0 0.0
      %1786 = vmatprep.subr.mxu0 0.0
      %1787 = vmatpush2.msra.mxu0 0.0
      %1788 = vmatprep.subr.mxu0 0.0
      %1789 = vmatpush2.msra.mxu0 0.0
      %1790 = vmatprep.subr.mxu0 0.0
      %1791 = vmatpush2.msra.mxu0 0.0
      %1792 = vmatprep.subr.mxu0 0.0
      %1793 = vmatpush2.msra.mxu0 0.0
      %1794 = vmatprep.subr.mxu0 0.0
      %1795 = vmatpush2.msra.mxu0 0.0
      %1796 = vmatprep.subr.mxu0 0.0
      %1797 = vmatpush2.msra.mxu0 0.0
      %1798 = vmatprep.subr.mxu0 0.0
      %1799 = vmatpush2.msra.mxu0 0.0
      %1800 = vmatprep.subr.mxu0 0.0
      %1801 = vmatpush2.msra.mxu0 0.0
      %1802 = vmatprep.mubr.f32.mxu0 0.0
      %v1803 = vand.u32 %v157, 4294901760
      %v1804 = vsub.f32 %v157, %v1803
      %v1805 = vand.u32 %v1804, 4294901760
      %1806 = vmatmul.mubr.f32.gmra.mxu0 %v1805
      %v1807 = vpop.f32.mrf.mxu0
      %v1808 = vadd.f32 %v1710, %v1807
      %v1809 = vpop.f32.mrf.mxu0
      %1810 = vmatprep.mubr.f32.mxu0 0.0
      %v1811 = vand.u32 %v160, 4294901760
      %v1812 = vsub.f32 %v160, %v1811
      %v1813 = vand.u32 %v1812, 4294901760
      %1814 = vmatmul.mubr.f32.gmra.mxu0 %v1813
      %v1815 = vpop.f32.mrf.mxu0
      %v1816 = vadd.f32 %v1717, %v1815
      %v1817 = vpop.f32.mrf.mxu0
      %1818 = vmatprep.mubr.f32.mxu0 0.0
      %v1819 = vand.u32 %v163, 4294901760
      %v1820 = vsub.f32 %v163, %v1819
      %v1821 = vand.u32 %v1820, 4294901760
      %1822 = vmatmul.mubr.f32.gmra.mxu0 %v1821
      %v1823 = vpop.f32.mrf.mxu0
      %v1824 = vadd.f32 %v1724, %v1823
      %v1825 = vpop.f32.mrf.mxu0
      %1826 = vmatprep.mubr.f32.mxu0 0.0
      %v1827 = vand.u32 %v166, 4294901760
      %v1828 = vsub.f32 %v166, %v1827
      %v1829 = vand.u32 %v1828, 4294901760
      %1830 = vmatmul.mubr.f32.gmra.mxu0 %v1829
      %v1831 = vpop.f32.mrf.mxu0
      %v1832 = vadd.f32 %v1731, %v1831
      %v1833 = vpop.f32.mrf.mxu0
      %1834 = vdwg.mxu0
      %1835 = vmatprep.subr.mxu0 0.0
      %1836 = vmatpush1.msra.mxu0 0.0
      %1837 = vmatprep.subr.mxu0 0.0
      %1838 = vmatpush1.msra.mxu0 0.0
      %1839 = vmatprep.subr.mxu0 0.0
      %1840 = vmatpush1.msra.mxu0 0.0
      %1841 = vmatprep.subr.mxu0 0.0
      %1842 = vmatpush1.msra.mxu0 0.0
      %1843 = vmatprep.subr.mxu0 0.0
      %1844 = vmatpush1.msra.mxu0 0.0
      %1845 = vmatprep.subr.mxu0 0.0
      %1846 = vmatpush1.msra.mxu0 0.0
      %1847 = vmatprep.subr.mxu0 0.0
      %1848 = vmatpush1.msra.mxu0 0.0
      %1849 = vmatprep.subr.mxu0 0.0
      %1850 = vmatpush1.msra.mxu0 0.0
      %1851 = vmatprep.subr.mxu0 0.0
      %1852 = vmatpush1.msra.mxu0 0.0
      %1853 = vmatprep.subr.mxu0 0.0
      %1854 = vmatpush1.msra.mxu0 0.0
      %1855 = vmatprep.subr.mxu0 0.0
      %1856 = vmatpush1.msra.mxu0 0.0
      %1857 = vmatprep.subr.mxu0 0.0
      %1858 = vmatpush1.msra.mxu0 0.0
      %1859 = vmatprep.subr.mxu0 0.0
      %v1860 = vand.u32 %v1414, 4294901760
      %v1861 = vsub.f32 %v1414, %v1860
      %v1862 = vand.u32 %v1861, 4294901760
      %1863 = vmatpush1.msra.mxu0 %v1862
      %1864 = vmatprep.subr.mxu0 0.0
      %v1865 = vand.u32 %v1413, 4294901760
      %v1866 = vsub.f32 %v1413, %v1865
      %v1867 = vand.u32 %v1866, 4294901760
      %1868 = vmatpush1.msra.mxu0 %v1867
      %1869 = vmatprep.subr.mxu0 0.0
      %v1870 = vand.u32 %v1412, 4294901760
      %v1871 = vsub.f32 %v1412, %v1870
      %v1872 = vand.u32 %v1871, 4294901760
      %1873 = vmatpush1.msra.mxu0 %v1872
      %1874 = vmatprep.subr.mxu0 0.0
      %v1875 = vand.u32 %v1411, 4294901760
      %v1876 = vsub.f32 %v1411, %v1875
      %v1877 = vand.u32 %v1876, 4294901760
      %1878 = vmatpush1.msra.mxu0 %v1877
      %1879 = vmatprep.subr.mxu0 0.0
      %1880 = vmatpush2.msra.mxu0 0.0
      %1881 = vmatprep.subr.mxu0 0.0
      %1882 = vmatpush2.msra.mxu0 0.0
      %1883 = vmatprep.subr.mxu0 0.0
      %1884 = vmatpush2.msra.mxu0 0.0
      %1885 = vmatprep.subr.mxu0 0.0
      %1886 = vmatpush2.msra.mxu0 0.0
      %1887 = vmatprep.subr.mxu0 0.0
      %1888 = vmatpush2.msra.mxu0 0.0
      %1889 = vmatprep.subr.mxu0 0.0
      %1890 = vmatpush2.msra.mxu0 0.0
      %1891 = vmatprep.subr.mxu0 0.0
      %1892 = vmatpush2.msra.mxu0 0.0
      %1893 = vmatprep.subr.mxu0 0.0
      %1894 = vmatpush2.msra.mxu0 0.0
      %1895 = vmatprep.subr.mxu0 0.0
      %1896 = vmatpush2.msra.mxu0 0.0
      %1897 = vmatprep.subr.mxu0 0.0
      %1898 = vmatpush2.msra.mxu0 0.0
      %1899 = vmatprep.subr.mxu0 0.0
      %1900 = vmatpush2.msra.mxu0 0.0
      %1901 = vmatprep.subr.mxu0 0.0
      %1902 = vmatpush2.msra.mxu0 0.0
      %1903 = vmatprep.subr.mxu0 0.0
      %1904 = vmatpush2.msra.mxu0 0.0
      %1905 = vmatprep.subr.mxu0 0.0
      %1906 = vmatpush2.msra.mxu0 0.0
      %1907 = vmatprep.subr.mxu0 0.0
      %1908 = vmatpush2.msra.mxu0 0.0
      %1909 = vmatprep.subr.mxu0 0.0
      %1910 = vmatpush2.msra.mxu0 0.0
      %1911 = vmatprep.mubr.f32.mxu0 0.0
      %v1912 = vand.u32 %v157, 4294901760
      %1913 = vmatmul.mubr.f32.gmra.mxu0 %v1912
      %v1914 = vpop.f32.mrf.mxu0
      %v1915 = vadd.f32 %v1808, %v1914
      %v1916 = vpop.f32.mrf.mxu0
      %1917 = vmatprep.mubr.f32.mxu0 0.0
      %v1918 = vand.u32 %v160, 4294901760
      %1919 = vmatmul.mubr.f32.gmra.mxu0 %v1918
      %v1920 = vpop.f32.mrf.mxu0
      %v1921 = vadd.f32 %v1816, %v1920
      %v1922 = vpop.f32.mrf.mxu0
      %1923 = vmatprep.mubr.f32.mxu0 0.0
      %v1924 = vand.u32 %v163, 4294901760
      %1925 = vmatmul.mubr.f32.gmra.mxu0 %v1924
      %v1926 = vpop.f32.mrf.mxu0
      %v1927 = vadd.f32 %v1824, %v1926
      %v1928 = vpop.f32.mrf.mxu0
      %1929 = vmatprep.mubr.f32.mxu0 0.0
      %v1930 = vand.u32 %v166, 4294901760
      %1931 = vmatmul.mubr.f32.gmra.mxu0 %v1930
      %v1932 = vpop.f32.mrf.mxu0
      %v1933 = vadd.f32 %v1832, %v1932
      %v1934 = vpop.f32.mrf.mxu0
      %1935 = vdwg.mxu0
      %1936 = vmatprep.subr.mxu0 0.0
      %1937 = vmatpush1.msra.mxu0 0.0
      %1938 = vmatprep.subr.mxu0 0.0
      %1939 = vmatpush1.msra.mxu0 0.0
      %1940 = vmatprep.subr.mxu0 0.0
      %1941 = vmatpush1.msra.mxu0 0.0
      %1942 = vmatprep.subr.mxu0 0.0
      %1943 = vmatpush1.msra.mxu0 0.0
      %1944 = vmatprep.subr.mxu0 0.0
      %1945 = vmatpush1.msra.mxu0 0.0
      %1946 = vmatprep.subr.mxu0 0.0
      %1947 = vmatpush1.msra.mxu0 0.0
      %1948 = vmatprep.subr.mxu0 0.0
      %1949 = vmatpush1.msra.mxu0 0.0
      %1950 = vmatprep.subr.mxu0 0.0
      %1951 = vmatpush1.msra.mxu0 0.0
      %1952 = vmatprep.subr.mxu0 0.0
      %1953 = vmatpush1.msra.mxu0 0.0
      %1954 = vmatprep.subr.mxu0 0.0
      %1955 = vmatpush1.msra.mxu0 0.0
      %1956 = vmatprep.subr.mxu0 0.0
      %1957 = vmatpush1.msra.mxu0 0.0
      %1958 = vmatprep.subr.mxu0 0.0
      %1959 = vmatpush1.msra.mxu0 0.0
      %1960 = vmatprep.subr.mxu0 0.0
      %v1961 = vand.u32 %v1414, 4294901760
      %1962 = vmatpush1.msra.mxu0 %v1961
      %1963 = vmatprep.subr.mxu0 0.0
      %v1964 = vand.u32 %v1413, 4294901760
      %1965 = vmatpush1.msra.mxu0 %v1964
      %1966 = vmatprep.subr.mxu0 0.0
      %v1967 = vand.u32 %v1412, 4294901760
      %1968 = vmatpush1.msra.mxu0 %v1967
      %1969 = vmatprep.subr.mxu0 0.0
      %v1970 = vand.u32 %v1411, 4294901760
      %1971 = vmatpush1.msra.mxu0 %v1970
      %1972 = vmatprep.subr.mxu0 0.0
      %1973 = vmatpush2.msra.mxu0 0.0
      %1974 = vmatprep.subr.mxu0 0.0
      %1975 = vmatpush2.msra.mxu0 0.0
      %1976 = vmatprep.subr.mxu0 0.0
      %1977 = vmatpush2.msra.mxu0 0.0
      %1978 = vmatprep.subr.mxu0 0.0
      %1979 = vmatpush2.msra.mxu0 0.0
      %1980 = vmatprep.subr.mxu0 0.0
      %1981 = vmatpush2.msra.mxu0 0.0
      %1982 = vmatprep.subr.mxu0 0.0
      %1983 = vmatpush2.msra.mxu0 0.0
      %1984 = vmatprep.subr.mxu0 0.0
      %1985 = vmatpush2.msra.mxu0 0.0
      %1986 = vmatprep.subr.mxu0 0.0
      %1987 = vmatpush2.msra.mxu0 0.0
      %1988 = vmatprep.subr.mxu0 0.0
      %1989 = vmatpush2.msra.mxu0 0.0
      %1990 = vmatprep.subr.mxu0 0.0
      %1991 = vmatpush2.msra.mxu0 0.0
      %1992 = vmatprep.subr.mxu0 0.0
      %1993 = vmatpush2.msra.mxu0 0.0
      %1994 = vmatprep.subr.mxu0 0.0
      %1995 = vmatpush2.msra.mxu0 0.0
      %1996 = vmatprep.subr.mxu0 0.0
      %1997 = vmatpush2.msra.mxu0 0.0
      %1998 = vmatprep.subr.mxu0 0.0
      %1999 = vmatpush2.msra.mxu0 0.0
      %2000 = vmatprep.subr.mxu0 0.0
      %2001 = vmatpush2.msra.mxu0 0.0
      %2002 = vmatprep.subr.mxu0 0.0
      %2003 = vmatpush2.msra.mxu0 0.0
      %2004 = vmatprep.mubr.f32.mxu0 0.0
      %v2005 = vand.u32 %v157, 4294901760
      %2006 = vmatmul.mubr.f32.gmra.mxu0 %v2005
      %v2007 = vpop.f32.mrf.mxu0
      %v2008 = vadd.f32 %v1915, %v2007
      %v2009 = vpop.f32.mrf.mxu0
      %2010 = vmatprep.mubr.f32.mxu0 0.0
      %v2011 = vand.u32 %v160, 4294901760
      %2012 = vmatmul.mubr.f32.gmra.mxu0 %v2011
      %v2013 = vpop.f32.mrf.mxu0
      %v2014 = vadd.f32 %v1921, %v2013
      %v2015 = vpop.f32.mrf.mxu0
      %2016 = vmatprep.mubr.f32.mxu0 0.0
      %v2017 = vand.u32 %v163, 4294901760
      %2018 = vmatmul.mubr.f32.gmra.mxu0 %v2017
      %v2019 = vpop.f32.mrf.mxu0
      %v2020 = vadd.f32 %v1927, %v2019
      %v2021 = vpop.f32.mrf.mxu0
      %2022 = vmatprep.mubr.f32.mxu0 0.0
      %v2023 = vand.u32 %v166, 4294901760
      %2024 = vmatmul.mubr.f32.gmra.mxu0 %v2023
      %v2025 = vpop.f32.mrf.mxu0
      %v2026 = vadd.f32 %v1933, %v2025
      %v2027 = vpop.f32.mrf.mxu0
      %2028 = vdwg.mxu0
      %2029 = vst.msk [vmem:[%s145 + $0x10] sm:$0xff] %vm782, %v2008
      %2030 = vst.msk [vmem:[%s145 + $0x30] sm:$0xff] %vm782, %v2014
      %2031 = vst.msk [vmem:[%s145 + $0x50] sm:$0xff] %vm782, %v2020
      %2032 = vst.msk [vmem:[%s145 + $0x70] sm:$0xff] %vm782, %v2026
      %s2033 = scalar_lea.vmem %s0, 96
      %v2034 = vld [vmem:[%s2033] sm:$0xff]
      %v2035 = vld [vmem:[%s2033 + $0x8] sm:$0xff]
      %v2036 = vld [vmem:[%s2033 + $0x10] sm:$0xff]
      %v2037 = vld [vmem:[%s2033 + $0x18] sm:$0xff]
      %2038 = vmatprep.subr.mxu0 0.0
      %2039 = vmatpush1.msra.mxu0 0.0
      %2040 = vmatprep.subr.mxu0 0.0
      %2041 = vmatpush1.msra.mxu0 0.0
      %2042 = vmatprep.subr.mxu0 0.0
      %2043 = vmatpush1.msra.mxu0 0.0
      %2044 = vmatprep.subr.mxu0 0.0
      %2045 = vmatpush1.msra.mxu0 0.0
      %2046 = vmatprep.subr.mxu0 0.0
      %2047 = vmatpush1.msra.mxu0 0.0
      %2048 = vmatprep.subr.mxu0 0.0
      %2049 = vmatpush1.msra.mxu0 0.0
      %2050 = vmatprep.subr.mxu0 0.0
      %2051 = vmatpush1.msra.mxu0 0.0
      %2052 = vmatprep.subr.mxu0 0.0
      %2053 = vmatpush1.msra.mxu0 0.0
      %2054 = vmatprep.subr.mxu0 0.0
      %2055 = vmatpush1.msra.mxu0 0.0
      %2056 = vmatprep.subr.mxu0 0.0
      %2057 = vmatpush1.msra.mxu0 0.0
      %2058 = vmatprep.subr.mxu0 0.0
      %2059 = vmatpush1.msra.mxu0 0.0
      %2060 = vmatprep.subr.mxu0 0.0
      %2061 = vmatpush1.msra.mxu0 0.0
      %2062 = vmatprep.subr.mxu0 0.0
      %v2063 = vand.u32 %v2037, 4294901760
      %2064 = vmatpush1.msra.mxu0 %v2063
      %2065 = vmatprep.subr.mxu0 0.0
      %v2066 = vand.u32 %v2036, 4294901760
      %2067 = vmatpush1.msra.mxu0 %v2066
      %2068 = vmatprep.subr.mxu0 0.0
      %v2069 = vand.u32 %v2035, 4294901760
      %2070 = vmatpush1.msra.mxu0 %v2069
      %2071 = vmatprep.subr.mxu0 0.0
      %v2072 = vand.u32 %v2034, 4294901760
      %2073 = vmatpush1.msra.mxu0 %v2072
      %2074 = vmatprep.subr.mxu0 0.0
      %2075 = vmatpush2.msra.mxu0 0.0
      %2076 = vmatprep.subr.mxu0 0.0
      %2077 = vmatpush2.msra.mxu0 0.0
      %2078 = vmatprep.subr.mxu0 0.0
      %2079 = vmatpush2.msra.mxu0 0.0
      %2080 = vmatprep.subr.mxu0 0.0
      %2081 = vmatpush2.msra.mxu0 0.0
      %2082 = vmatprep.subr.mxu0 0.0
      %2083 = vmatpush2.msra.mxu0 0.0
      %2084 = vmatprep.subr.mxu0 0.0
      %2085 = vmatpush2.msra.mxu0 0.0
      %2086 = vmatprep.subr.mxu0 0.0
      %2087 = vmatpush2.msra.mxu0 0.0
      %2088 = vmatprep.subr.mxu0 0.0
      %2089 = vmatpush2.msra.mxu0 0.0
      %2090 = vmatprep.subr.mxu0 0.0
      %2091 = vmatpush2.msra.mxu0 0.0
      %2092 = vmatprep.subr.mxu0 0.0
      %2093 = vmatpush2.msra.mxu0 0.0
      %2094 = vmatprep.subr.mxu0 0.0
      %2095 = vmatpush2.msra.mxu0 0.0
      %2096 = vmatprep.subr.mxu0 0.0
      %2097 = vmatpush2.msra.mxu0 0.0
      %2098 = vmatprep.subr.mxu0 0.0
      %2099 = vmatpush2.msra.mxu0 0.0
      %2100 = vmatprep.subr.mxu0 0.0
      %2101 = vmatpush2.msra.mxu0 0.0
      %2102 = vmatprep.subr.mxu0 0.0
      %2103 = vmatpush2.msra.mxu0 0.0
      %2104 = vmatprep.subr.mxu0 0.0
      %2105 = vmatpush2.msra.mxu0 0.0
      %2106 = vmatprep.mubr.f32.mxu0 0.0
      %v2107 = vand.u32 %v157, 4294901760
      %v2108 = vsub.f32 %v157, %v2107
      %v2109 = vand.u32 %v2108, 4294901760
      %v2110 = vsub.f32 %v2108, %v2109
      %v2111 = vand.u32 %v2110, 4294901760
      %2112 = vmatmul.mubr.f32.gmra.mxu0 %v2111
      %v2113 = vpop.f32.mrf.mxu0
      %v2114 = vadd.f32 0.0, %v2113
      %v2115 = vpop.f32.mrf.mxu0
      %2116 = vmatprep.mubr.f32.mxu0 0.0
      %v2117 = vand.u32 %v160, 4294901760
      %v2118 = vsub.f32 %v160, %v2117
      %v2119 = vand.u32 %v2118, 4294901760
      %v2120 = vsub.f32 %v2118, %v2119
      %v2121 = vand.u32 %v2120, 4294901760
      %2122 = vmatmul.mubr.f32.gmra.mxu0 %v2121
      %v2123 = vpop.f32.mrf.mxu0
      %v2124 = vadd.f32 0.0, %v2123
      %v2125 = vpop.f32.mrf.mxu0
      %2126 = vmatprep.mubr.f32.mxu0 0.0
      %v2127 = vand.u32 %v163, 4294901760
      %v2128 = vsub.f32 %v163, %v2127
      %v2129 = vand.u32 %v2128, 4294901760
      %v2130 = vsub.f32 %v2128, %v2129
      %v2131 = vand.u32 %v2130, 4294901760
      %2132 = vmatmul.mubr.f32.gmra.mxu0 %v2131
      %v2133 = vpop.f32.mrf.mxu0
      %v2134 = vadd.f32 0.0, %v2133
      %v2135 = vpop.f32.mrf.mxu0
      %2136 = vmatprep.mubr.f32.mxu0 0.0
      %v2137 = vand.u32 %v166, 4294901760
      %v2138 = vsub.f32 %v166, %v2137
      %v2139 = vand.u32 %v2138, 4294901760
      %v2140 = vsub.f32 %v2138, %v2139
      %v2141 = vand.u32 %v2140, 4294901760
      %2142 = vmatmul.mubr.f32.gmra.mxu0 %v2141
      %v2143 = vpop.f32.mrf.mxu0
      %v2144 = vadd.f32 0.0, %v2143
      %v2145 = vpop.f32.mrf.mxu0
      %2146 = vdwg.mxu0
      %2147 = vmatprep.subr.mxu0 0.0
      %2148 = vmatpush1.msra.mxu0 0.0
      %2149 = vmatprep.subr.mxu0 0.0
      %2150 = vmatpush1.msra.mxu0 0.0
      %2151 = vmatprep.subr.mxu0 0.0
      %2152 = vmatpush1.msra.mxu0 0.0
      %2153 = vmatprep.subr.mxu0 0.0
      %2154 = vmatpush1.msra.mxu0 0.0
      %2155 = vmatprep.subr.mxu0 0.0
      %2156 = vmatpush1.msra.mxu0 0.0
      %2157 = vmatprep.subr.mxu0 0.0
      %2158 = vmatpush1.msra.mxu0 0.0
      %2159 = vmatprep.subr.mxu0 0.0
      %2160 = vmatpush1.msra.mxu0 0.0
      %2161 = vmatprep.subr.mxu0 0.0
      %2162 = vmatpush1.msra.mxu0 0.0
      %2163 = vmatprep.subr.mxu0 0.0
      %2164 = vmatpush1.msra.mxu0 0.0
      %2165 = vmatprep.subr.mxu0 0.0
      %2166 = vmatpush1.msra.mxu0 0.0
      %2167 = vmatprep.subr.mxu0 0.0
      %2168 = vmatpush1.msra.mxu0 0.0
      %2169 = vmatprep.subr.mxu0 0.0
      %2170 = vmatpush1.msra.mxu0 0.0
      %2171 = vmatprep.subr.mxu0 0.0
      %v2172 = vand.u32 %v2037, 4294901760
      %v2173 = vsub.f32 %v2037, %v2172
      %v2174 = vand.u32 %v2173, 4294901760
      %v2175 = vsub.f32 %v2173, %v2174
      %v2176 = vand.u32 %v2175, 4294901760
      %2177 = vmatpush1.msra.mxu0 %v2176
      %2178 = vmatprep.subr.mxu0 0.0
      %v2179 = vand.u32 %v2036, 4294901760
      %v2180 = vsub.f32 %v2036, %v2179
      %v2181 = vand.u32 %v2180, 4294901760
      %v2182 = vsub.f32 %v2180, %v2181
      %v2183 = vand.u32 %v2182, 4294901760
      %2184 = vmatpush1.msra.mxu0 %v2183
      %2185 = vmatprep.subr.mxu0 0.0
      %v2186 = vand.u32 %v2035, 4294901760
      %v2187 = vsub.f32 %v2035, %v2186
      %v2188 = vand.u32 %v2187, 4294901760
      %v2189 = vsub.f32 %v2187, %v2188
      %v2190 = vand.u32 %v2189, 4294901760
      %2191 = vmatpush1.msra.mxu0 %v2190
      %2192 = vmatprep.subr.mxu0 0.0
      %v2193 = vand.u32 %v2034, 4294901760
      %v2194 = vsub.f32 %v2034, %v2193
      %v2195 = vand.u32 %v2194, 4294901760
      %v2196 = vsub.f32 %v2194, %v2195
      %v2197 = vand.u32 %v2196, 4294901760
      %2198 = vmatpush1.msra.mxu0 %v2197
      %2199 = vmatprep.subr.mxu0 0.0
      %2200 = vmatpush2.msra.mxu0 0.0
      %2201 = vmatprep.subr.mxu0 0.0
      %2202 = vmatpush2.msra.mxu0 0.0
      %2203 = vmatprep.subr.mxu0 0.0
      %2204 = vmatpush2.msra.mxu0 0.0
      %2205 = vmatprep.subr.mxu0 0.0
      %2206 = vmatpush2.msra.mxu0 0.0
      %2207 = vmatprep.subr.mxu0 0.0
      %2208 = vmatpush2.msra.mxu0 0.0
      %2209 = vmatprep.subr.mxu0 0.0
      %2210 = vmatpush2.msra.mxu0 0.0
      %2211 = vmatprep.subr.mxu0 0.0
      %2212 = vmatpush2.msra.mxu0 0.0
      %2213 = vmatprep.subr.mxu0 0.0
      %2214 = vmatpush2.msra.mxu0 0.0
      %2215 = vmatprep.subr.mxu0 0.0
      %2216 = vmatpush2.msra.mxu0 0.0
      %2217 = vmatprep.subr.mxu0 0.0
      %2218 = vmatpush2.msra.mxu0 0.0
      %2219 = vmatprep.subr.mxu0 0.0
      %2220 = vmatpush2.msra.mxu0 0.0
      %2221 = vmatprep.subr.mxu0 0.0
      %2222 = vmatpush2.msra.mxu0 0.0
      %2223 = vmatprep.subr.mxu0 0.0
      %2224 = vmatpush2.msra.mxu0 0.0
      %2225 = vmatprep.subr.mxu0 0.0
      %2226 = vmatpush2.msra.mxu0 0.0
      %2227 = vmatprep.subr.mxu0 0.0
      %2228 = vmatpush2.msra.mxu0 0.0
      %2229 = vmatprep.subr.mxu0 0.0
      %2230 = vmatpush2.msra.mxu0 0.0
      %2231 = vmatprep.mubr.f32.mxu0 0.0
      %v2232 = vand.u32 %v157, 4294901760
      %2233 = vmatmul.mubr.f32.gmra.mxu0 %v2232
      %v2234 = vpop.f32.mrf.mxu0
      %v2235 = vadd.f32 %v2114, %v2234
      %v2236 = vpop.f32.mrf.mxu0
      %2237 = vmatprep.mubr.f32.mxu0 0.0
      %v2238 = vand.u32 %v160, 4294901760
      %2239 = vmatmul.mubr.f32.gmra.mxu0 %v2238
      %v2240 = vpop.f32.mrf.mxu0
      %v2241 = vadd.f32 %v2124, %v2240
      %v2242 = vpop.f32.mrf.mxu0
      %2243 = vmatprep.mubr.f32.mxu0 0.0
      %v2244 = vand.u32 %v163, 4294901760
      %2245 = vmatmul.mubr.f32.gmra.mxu0 %v2244
      %v2246 = vpop.f32.mrf.mxu0
      %v2247 = vadd.f32 %v2134, %v2246
      %v2248 = vpop.f32.mrf.mxu0
      %2249 = vmatprep.mubr.f32.mxu0 0.0
      %v2250 = vand.u32 %v166, 4294901760
      %2251 = vmatmul.mubr.f32.gmra.mxu0 %v2250
      %v2252 = vpop.f32.mrf.mxu0
      %v2253 = vadd.f32 %v2144, %v2252
      %v2254 = vpop.f32.mrf.mxu0
      %2255 = vdwg.mxu0
      %2256 = vmatprep.subr.mxu0 0.0
      %2257 = vmatpush1.msra.mxu0 0.0
      %2258 = vmatprep.subr.mxu0 0.0
      %2259 = vmatpush1.msra.mxu0 0.0
      %2260 = vmatprep.subr.mxu0 0.0
      %2261 = vmatpush1.msra.mxu0 0.0
      %2262 = vmatprep.subr.mxu0 0.0
      %2263 = vmatpush1.msra.mxu0 0.0
      %2264 = vmatprep.subr.mxu0 0.0
      %2265 = vmatpush1.msra.mxu0 0.0
      %2266 = vmatprep.subr.mxu0 0.0
      %2267 = vmatpush1.msra.mxu0 0.0
      %2268 = vmatprep.subr.mxu0 0.0
      %2269 = vmatpush1.msra.mxu0 0.0
      %2270 = vmatprep.subr.mxu0 0.0
      %2271 = vmatpush1.msra.mxu0 0.0
      %2272 = vmatprep.subr.mxu0 0.0
      %2273 = vmatpush1.msra.mxu0 0.0
      %2274 = vmatprep.subr.mxu0 0.0
      %2275 = vmatpush1.msra.mxu0 0.0
      %2276 = vmatprep.subr.mxu0 0.0
      %2277 = vmatpush1.msra.mxu0 0.0
      %2278 = vmatprep.subr.mxu0 0.0
      %2279 = vmatpush1.msra.mxu0 0.0
      %2280 = vmatprep.subr.mxu0 0.0
      %v2281 = vand.u32 %v2037, 4294901760
      %v2282 = vsub.f32 %v2037, %v2281
      %2283 = vmatpush1.msra.mxu0 %v2282
      %2284 = vmatprep.subr.mxu0 0.0
      %v2285 = vand.u32 %v2036, 4294901760
      %v2286 = vsub.f32 %v2036, %v2285
      %2287 = vmatpush1.msra.mxu0 %v2286
      %2288 = vmatprep.subr.mxu0 0.0
      %v2289 = vand.u32 %v2035, 4294901760
      %v2290 = vsub.f32 %v2035, %v2289
      %2291 = vmatpush1.msra.mxu0 %v2290
      %2292 = vmatprep.subr.mxu0 0.0
      %v2293 = vand.u32 %v2034, 4294901760
      %v2294 = vsub.f32 %v2034, %v2293
      %2295 = vmatpush1.msra.mxu0 %v2294
      %2296 = vmatprep.subr.mxu0 0.0
      %2297 = vmatpush2.msra.mxu0 0.0
      %2298 = vmatprep.subr.mxu0 0.0
      %2299 = vmatpush2.msra.mxu0 0.0
      %2300 = vmatprep.subr.mxu0 0.0
      %2301 = vmatpush2.msra.mxu0 0.0
      %2302 = vmatprep.subr.mxu0 0.0
      %2303 = vmatpush2.msra.mxu0 0.0
      %2304 = vmatprep.subr.mxu0 0.0
      %2305 = vmatpush2.msra.mxu0 0.0
      %2306 = vmatprep.subr.mxu0 0.0
      %2307 = vmatpush2.msra.mxu0 0.0
      %2308 = vmatprep.subr.mxu0 0.0
      %2309 = vmatpush2.msra.mxu0 0.0
      %2310 = vmatprep.subr.mxu0 0.0
      %2311 = vmatpush2.msra.mxu0 0.0
      %2312 = vmatprep.subr.mxu0 0.0
      %2313 = vmatpush2.msra.mxu0 0.0
      %2314 = vmatprep.subr.mxu0 0.0
      %2315 = vmatpush2.msra.mxu0 0.0
      %2316 = vmatprep.subr.mxu0 0.0
      %2317 = vmatpush2.msra.mxu0 0.0
      %2318 = vmatprep.subr.mxu0 0.0
      %2319 = vmatpush2.msra.mxu0 0.0
      %2320 = vmatprep.subr.mxu0 0.0
      %2321 = vmatpush2.msra.mxu0 0.0
      %2322 = vmatprep.subr.mxu0 0.0
      %2323 = vmatpush2.msra.mxu0 0.0
      %2324 = vmatprep.subr.mxu0 0.0
      %2325 = vmatpush2.msra.mxu0 0.0
      %2326 = vmatprep.subr.mxu0 0.0
      %2327 = vmatpush2.msra.mxu0 0.0
      %2328 = vmatprep.mubr.f32.mxu0 0.0
      %v2329 = vand.u32 %v157, 4294901760
      %v2330 = vsub.f32 %v157, %v2329
      %2331 = vmatmul.mubr.f32.gmra.mxu0 %v2330
      %v2332 = vpop.f32.mrf.mxu0
      %v2333 = vadd.f32 %v2235, %v2332
      %v2334 = vpop.f32.mrf.mxu0
      %2335 = vmatprep.mubr.f32.mxu0 0.0
      %v2336 = vand.u32 %v160, 4294901760
      %v2337 = vsub.f32 %v160, %v2336
      %2338 = vmatmul.mubr.f32.gmra.mxu0 %v2337
      %v2339 = vpop.f32.mrf.mxu0
      %v2340 = vadd.f32 %v2241, %v2339
      %v2341 = vpop.f32.mrf.mxu0
      %2342 = vmatprep.mubr.f32.mxu0 0.0
      %v2343 = vand.u32 %v163, 4294901760
      %v2344 = vsub.f32 %v163, %v2343
      %2345 = vmatmul.mubr.f32.gmra.mxu0 %v2344
      %v2346 = vpop.f32.mrf.mxu0
      %v2347 = vadd.f32 %v2247, %v2346
      %v2348 = vpop.f32.mrf.mxu0
      %2349 = vmatprep.mubr.f32.mxu0 0.0
      %v2350 = vand.u32 %v166, 4294901760
      %v2351 = vsub.f32 %v166, %v2350
      %2352 = vmatmul.mubr.f32.gmra.mxu0 %v2351
      %v2353 = vpop.f32.mrf.mxu0
      %v2354 = vadd.f32 %v2253, %v2353
      %v2355 = vpop.f32.mrf.mxu0
      %2356 = vdwg.mxu0
      %2357 = vmatprep.subr.mxu0 0.0
      %2358 = vmatpush1.msra.mxu0 0.0
      %2359 = vmatprep.subr.mxu0 0.0
      %2360 = vmatpush1.msra.mxu0 0.0
      %2361 = vmatprep.subr.mxu0 0.0
      %2362 = vmatpush1.msra.mxu0 0.0
      %2363 = vmatprep.subr.mxu0 0.0
      %2364 = vmatpush1.msra.mxu0 0.0
      %2365 = vmatprep.subr.mxu0 0.0
      %2366 = vmatpush1.msra.mxu0 0.0
      %2367 = vmatprep.subr.mxu0 0.0
      %2368 = vmatpush1.msra.mxu0 0.0
      %2369 = vmatprep.subr.mxu0 0.0
      %2370 = vmatpush1.msra.mxu0 0.0
      %2371 = vmatprep.subr.mxu0 0.0
      %2372 = vmatpush1.msra.mxu0 0.0
      %2373 = vmatprep.subr.mxu0 0.0
      %2374 = vmatpush1.msra.mxu0 0.0
      %2375 = vmatprep.subr.mxu0 0.0
      %2376 = vmatpush1.msra.mxu0 0.0
      %2377 = vmatprep.subr.mxu0 0.0
      %2378 = vmatpush1.msra.mxu0 0.0
      %2379 = vmatprep.subr.mxu0 0.0
      %2380 = vmatpush1.msra.mxu0 0.0
      %2381 = vmatprep.subr.mxu0 0.0
      %v2382 = vand.u32 %v2037, 4294901760
      %2383 = vmatpush1.msra.mxu0 %v2382
      %2384 = vmatprep.subr.mxu0 0.0
      %v2385 = vand.u32 %v2036, 4294901760
      %2386 = vmatpush1.msra.mxu0 %v2385
      %2387 = vmatprep.subr.mxu0 0.0
      %v2388 = vand.u32 %v2035, 4294901760
      %2389 = vmatpush1.msra.mxu0 %v2388
      %2390 = vmatprep.subr.mxu0 0.0
      %v2391 = vand.u32 %v2034, 4294901760
      %2392 = vmatpush1.msra.mxu0 %v2391
      %2393 = vmatprep.subr.mxu0 0.0
      %2394 = vmatpush2.msra.mxu0 0.0
      %2395 = vmatprep.subr.mxu0 0.0
      %2396 = vmatpush2.msra.mxu0 0.0
      %2397 = vmatprep.subr.mxu0 0.0
      %2398 = vmatpush2.msra.mxu0 0.0
      %2399 = vmatprep.subr.mxu0 0.0
      %2400 = vmatpush2.msra.mxu0 0.0
      %2401 = vmatprep.subr.mxu0 0.0
      %2402 = vmatpush2.msra.mxu0 0.0
      %2403 = vmatprep.subr.mxu0 0.0
      %2404 = vmatpush2.msra.mxu0 0.0
      %2405 = vmatprep.subr.mxu0 0.0
      %2406 = vmatpush2.msra.mxu0 0.0
      %2407 = vmatprep.subr.mxu0 0.0
      %2408 = vmatpush2.msra.mxu0 0.0
      %2409 = vmatprep.subr.mxu0 0.0
      %2410 = vmatpush2.msra.mxu0 0.0
      %2411 = vmatprep.subr.mxu0 0.0
      %2412 = vmatpush2.msra.mxu0 0.0
      %2413 = vmatprep.subr.mxu0 0.0
      %2414 = vmatpush2.msra.mxu0 0.0
      %2415 = vmatprep.subr.mxu0 0.0
      %2416 = vmatpush2.msra.mxu0 0.0
      %2417 = vmatprep.subr.mxu0 0.0
      %2418 = vmatpush2.msra.mxu0 0.0
      %2419 = vmatprep.subr.mxu0 0.0
      %2420 = vmatpush2.msra.mxu0 0.0
      %2421 = vmatprep.subr.mxu0 0.0
      %2422 = vmatpush2.msra.mxu0 0.0
      %2423 = vmatprep.subr.mxu0 0.0
      %2424 = vmatpush2.msra.mxu0 0.0
      %2425 = vmatprep.mubr.f32.mxu0 0.0
      %v2426 = vand.u32 %v157, 4294901760
      %v2427 = vsub.f32 %v157, %v2426
      %v2428 = vand.u32 %v2427, 4294901760
      %2429 = vmatmul.mubr.f32.gmra.mxu0 %v2428
      %v2430 = vpop.f32.mrf.mxu0
      %v2431 = vadd.f32 %v2333, %v2430
      %v2432 = vpop.f32.mrf.mxu0
      %2433 = vmatprep.mubr.f32.mxu0 0.0
      %v2434 = vand.u32 %v160, 4294901760
      %v2435 = vsub.f32 %v160, %v2434
      %v2436 = vand.u32 %v2435, 4294901760
      %2437 = vmatmul.mubr.f32.gmra.mxu0 %v2436
      %v2438 = vpop.f32.mrf.mxu0
      %v2439 = vadd.f32 %v2340, %v2438
      %v2440 = vpop.f32.mrf.mxu0
      %2441 = vmatprep.mubr.f32.mxu0 0.0
      %v2442 = vand.u32 %v163, 4294901760
      %v2443 = vsub.f32 %v163, %v2442
      %v2444 = vand.u32 %v2443, 4294901760
      %2445 = vmatmul.mubr.f32.gmra.mxu0 %v2444
      %v2446 = vpop.f32.mrf.mxu0
      %v2447 = vadd.f32 %v2347, %v2446
      %v2448 = vpop.f32.mrf.mxu0
      %2449 = vmatprep.mubr.f32.mxu0 0.0
      %v2450 = vand.u32 %v166, 4294901760
      %v2451 = vsub.f32 %v166, %v2450
      %v2452 = vand.u32 %v2451, 4294901760
      %2453 = vmatmul.mubr.f32.gmra.mxu0 %v2452
      %v2454 = vpop.f32.mrf.mxu0
      %v2455 = vadd.f32 %v2354, %v2454
      %v2456 = vpop.f32.mrf.mxu0
      %2457 = vdwg.mxu0
      %2458 = vmatprep.subr.mxu0 0.0
      %2459 = vmatpush1.msra.mxu0 0.0
      %2460 = vmatprep.subr.mxu0 0.0
      %2461 = vmatpush1.msra.mxu0 0.0
      %2462 = vmatprep.subr.mxu0 0.0
      %2463 = vmatpush1.msra.mxu0 0.0
      %2464 = vmatprep.subr.mxu0 0.0
      %2465 = vmatpush1.msra.mxu0 0.0
      %2466 = vmatprep.subr.mxu0 0.0
      %2467 = vmatpush1.msra.mxu0 0.0
      %2468 = vmatprep.subr.mxu0 0.0
      %2469 = vmatpush1.msra.mxu0 0.0
      %2470 = vmatprep.subr.mxu0 0.0
      %2471 = vmatpush1.msra.mxu0 0.0
      %2472 = vmatprep.subr.mxu0 0.0
      %2473 = vmatpush1.msra.mxu0 0.0
      %2474 = vmatprep.subr.mxu0 0.0
      %2475 = vmatpush1.msra.mxu0 0.0
      %2476 = vmatprep.subr.mxu0 0.0
      %2477 = vmatpush1.msra.mxu0 0.0
      %2478 = vmatprep.subr.mxu0 0.0
      %2479 = vmatpush1.msra.mxu0 0.0
      %2480 = vmatprep.subr.mxu0 0.0
      %2481 = vmatpush1.msra.mxu0 0.0
      %2482 = vmatprep.subr.mxu0 0.0
      %v2483 = vand.u32 %v2037, 4294901760
      %v2484 = vsub.f32 %v2037, %v2483
      %v2485 = vand.u32 %v2484, 4294901760
      %2486 = vmatpush1.msra.mxu0 %v2485
      %2487 = vmatprep.subr.mxu0 0.0
      %v2488 = vand.u32 %v2036, 4294901760
      %v2489 = vsub.f32 %v2036, %v2488
      %v2490 = vand.u32 %v2489, 4294901760
      %2491 = vmatpush1.msra.mxu0 %v2490
      %2492 = vmatprep.subr.mxu0 0.0
      %v2493 = vand.u32 %v2035, 4294901760
      %v2494 = vsub.f32 %v2035, %v2493
      %v2495 = vand.u32 %v2494, 4294901760
      %2496 = vmatpush1.msra.mxu0 %v2495
      %2497 = vmatprep.subr.mxu0 0.0
      %v2498 = vand.u32 %v2034, 4294901760
      %v2499 = vsub.f32 %v2034, %v2498
      %v2500 = vand.u32 %v2499, 4294901760
      %2501 = vmatpush1.msra.mxu0 %v2500
      %2502 = vmatprep.subr.mxu0 0.0
      %2503 = vmatpush2.msra.mxu0 0.0
      %2504 = vmatprep.subr.mxu0 0.0
      %2505 = vmatpush2.msra.mxu0 0.0
      %2506 = vmatprep.subr.mxu0 0.0
      %2507 = vmatpush2.msra.mxu0 0.0
      %2508 = vmatprep.subr.mxu0 0.0
      %2509 = vmatpush2.msra.mxu0 0.0
      %2510 = vmatprep.subr.mxu0 0.0
      %2511 = vmatpush2.msra.mxu0 0.0
      %2512 = vmatprep.subr.mxu0 0.0
      %2513 = vmatpush2.msra.mxu0 0.0
      %2514 = vmatprep.subr.mxu0 0.0
      %2515 = vmatpush2.msra.mxu0 0.0
      %2516 = vmatprep.subr.mxu0 0.0
      %2517 = vmatpush2.msra.mxu0 0.0
      %2518 = vmatprep.subr.mxu0 0.0
      %2519 = vmatpush2.msra.mxu0 0.0
      %2520 = vmatprep.subr.mxu0 0.0
      %2521 = vmatpush2.msra.mxu0 0.0
      %2522 = vmatprep.subr.mxu0 0.0
      %2523 = vmatpush2.msra.mxu0 0.0
      %2524 = vmatprep.subr.mxu0 0.0
      %2525 = vmatpush2.msra.mxu0 0.0
      %2526 = vmatprep.subr.mxu0 0.0
      %2527 = vmatpush2.msra.mxu0 0.0
      %2528 = vmatprep.subr.mxu0 0.0
      %2529 = vmatpush2.msra.mxu0 0.0
      %2530 = vmatprep.subr.mxu0 0.0
      %2531 = vmatpush2.msra.mxu0 0.0
      %2532 = vmatprep.subr.mxu0 0.0
      %2533 = vmatpush2.msra.mxu0 0.0
      %2534 = vmatprep.mubr.f32.mxu0 0.0
      %v2535 = vand.u32 %v157, 4294901760
      %2536 = vmatmul.mubr.f32.gmra.mxu0 %v2535
      %v2537 = vpop.f32.mrf.mxu0
      %v2538 = vadd.f32 %v2431, %v2537
      %v2539 = vpop.f32.mrf.mxu0
      %2540 = vmatprep.mubr.f32.mxu0 0.0
      %v2541 = vand.u32 %v160, 4294901760
      %2542 = vmatmul.mubr.f32.gmra.mxu0 %v2541
      %v2543 = vpop.f32.mrf.mxu0
      %v2544 = vadd.f32 %v2439, %v2543
      %v2545 = vpop.f32.mrf.mxu0
      %2546 = vmatprep.mubr.f32.mxu0 0.0
      %v2547 = vand.u32 %v163, 4294901760
      %2548 = vmatmul.mubr.f32.gmra.mxu0 %v2547
      %v2549 = vpop.f32.mrf.mxu0
      %v2550 = vadd.f32 %v2447, %v2549
      %v2551 = vpop.f32.mrf.mxu0
      %2552 = vmatprep.mubr.f32.mxu0 0.0
      %v2553 = vand.u32 %v166, 4294901760
      %2554 = vmatmul.mubr.f32.gmra.mxu0 %v2553
      %v2555 = vpop.f32.mrf.mxu0
      %v2556 = vadd.f32 %v2455, %v2555
      %v2557 = vpop.f32.mrf.mxu0
      %2558 = vdwg.mxu0
      %2559 = vmatprep.subr.mxu0 0.0
      %2560 = vmatpush1.msra.mxu0 0.0
      %2561 = vmatprep.subr.mxu0 0.0
      %2562 = vmatpush1.msra.mxu0 0.0
      %2563 = vmatprep.subr.mxu0 0.0
      %2564 = vmatpush1.msra.mxu0 0.0
      %2565 = vmatprep.subr.mxu0 0.0
      %2566 = vmatpush1.msra.mxu0 0.0
      %2567 = vmatprep.subr.mxu0 0.0
      %2568 = vmatpush1.msra.mxu0 0.0
      %2569 = vmatprep.subr.mxu0 0.0
      %2570 = vmatpush1.msra.mxu0 0.0
      %2571 = vmatprep.subr.mxu0 0.0
      %2572 = vmatpush1.msra.mxu0 0.0
      %2573 = vmatprep.subr.mxu0 0.0
      %2574 = vmatpush1.msra.mxu0 0.0
      %2575 = vmatprep.subr.mxu0 0.0
      %2576 = vmatpush1.msra.mxu0 0.0
      %2577 = vmatprep.subr.mxu0 0.0
      %2578 = vmatpush1.msra.mxu0 0.0
      %2579 = vmatprep.subr.mxu0 0.0
      %2580 = vmatpush1.msra.mxu0 0.0
      %2581 = vmatprep.subr.mxu0 0.0
      %2582 = vmatpush1.msra.mxu0 0.0
      %2583 = vmatprep.subr.mxu0 0.0
      %v2584 = vand.u32 %v2037, 4294901760
      %2585 = vmatpush1.msra.mxu0 %v2584
      %2586 = vmatprep.subr.mxu0 0.0
      %v2587 = vand.u32 %v2036, 4294901760
      %2588 = vmatpush1.msra.mxu0 %v2587
      %2589 = vmatprep.subr.mxu0 0.0
      %v2590 = vand.u32 %v2035, 4294901760
      %2591 = vmatpush1.msra.mxu0 %v2590
      %2592 = vmatprep.subr.mxu0 0.0
      %v2593 = vand.u32 %v2034, 4294901760
      %2594 = vmatpush1.msra.mxu0 %v2593
      %2595 = vmatprep.subr.mxu0 0.0
      %2596 = vmatpush2.msra.mxu0 0.0
      %2597 = vmatprep.subr.mxu0 0.0
      %2598 = vmatpush2.msra.mxu0 0.0
      %2599 = vmatprep.subr.mxu0 0.0
      %2600 = vmatpush2.msra.mxu0 0.0
      %2601 = vmatprep.subr.mxu0 0.0
      %2602 = vmatpush2.msra.mxu0 0.0
      %2603 = vmatprep.subr.mxu0 0.0
      %2604 = vmatpush2.msra.mxu0 0.0
      %2605 = vmatprep.subr.mxu0 0.0
      %2606 = vmatpush2.msra.mxu0 0.0
      %2607 = vmatprep.subr.mxu0 0.0
      %2608 = vmatpush2.msra.mxu0 0.0
      %2609 = vmatprep.subr.mxu0 0.0
      %2610 = vmatpush2.msra.mxu0 0.0
      %2611 = vmatprep.subr.mxu0 0.0
      %2612 = vmatpush2.msra.mxu0 0.0
      %2613 = vmatprep.subr.mxu0 0.0
      %2614 = vmatpush2.msra.mxu0 0.0
      %2615 = vmatprep.subr.mxu0 0.0
      %2616 = vmatpush2.msra.mxu0 0.0
      %2617 = vmatprep.subr.mxu0 0.0
      %2618 = vmatpush2.msra.mxu0 0.0
      %2619 = vmatprep.subr.mxu0 0.0
      %2620 = vmatpush2.msra.mxu0 0.0
      %2621 = vmatprep.subr.mxu0 0.0
      %2622 = vmatpush2.msra.mxu0 0.0
      %2623 = vmatprep.subr.mxu0 0.0
      %2624 = vmatpush2.msra.mxu0 0.0
      %2625 = vmatprep.subr.mxu0 0.0
      %2626 = vmatpush2.msra.mxu0 0.0
      %2627 = vmatprep.mubr.f32.mxu0 0.0
      %v2628 = vand.u32 %v157, 4294901760
      %2629 = vmatmul.mubr.f32.gmra.mxu0 %v2628
      %v2630 = vpop.f32.mrf.mxu0
      %v2631 = vadd.f32 %v2538, %v2630
      %v2632 = vpop.f32.mrf.mxu0
      %2633 = vmatprep.mubr.f32.mxu0 0.0
      %v2634 = vand.u32 %v160, 4294901760
      %2635 = vmatmul.mubr.f32.gmra.mxu0 %v2634
      %v2636 = vpop.f32.mrf.mxu0
      %v2637 = vadd.f32 %v2544, %v2636
      %v2638 = vpop.f32.mrf.mxu0
      %2639 = vmatprep.mubr.f32.mxu0 0.0
      %v2640 = vand.u32 %v163, 4294901760
      %2641 = vmatmul.mubr.f32.gmra.mxu0 %v2640
      %v2642 = vpop.f32.mrf.mxu0
      %v2643 = vadd.f32 %v2550, %v2642
      %v2644 = vpop.f32.mrf.mxu0
      %2645 = vmatprep.mubr.f32.mxu0 0.0
      %v2646 = vand.u32 %v166, 4294901760
      %2647 = vmatmul.mubr.f32.gmra.mxu0 %v2646
      %v2648 = vpop.f32.mrf.mxu0
      %v2649 = vadd.f32 %v2556, %v2648
      %v2650 = vpop.f32.mrf.mxu0
      %2651 = vdwg.mxu0
      %2652 = vst.msk [vmem:[%s145 + $0x18] sm:$0xff] %vm782, %v2631
      %2653 = vst.msk [vmem:[%s145 + $0x38] sm:$0xff] %vm782, %v2637
      %2654 = vst.msk [vmem:[%s145 + $0x58] sm:$0xff] %vm782, %v2643
      %2655 = vst.msk [vmem:[%s145 + $0x78] sm:$0xff] %vm782, %v2649
      %s2656 = smul.u32 16, %s13
      %p2657 = scmp.lt.s32.totalorder %s2656, 31
      %s2658 = scalar_select %p2657, %s2656, 31
      %s2659 = smul.addr %s2658, 8
      %s2660 = scalar_lea.vmem %s2, %s2659
      // Predicated region
      $region29: #{tpu_custom_call.1} parent=27 // pred_check
        %p2661 = pneg %p78
      $region30: #{tpu_custom_call.1} parent=27 // pred_check_branch
        %2663 = sbr.rel (%p2661) target = $region32
      $region31: #{tpu_custom_call.1} parent=27 // pred_region
        %s2664 = smul.u32 16, %s13
      $region32: #{tpu_custom_call.1} parent=27 // pred_fallthru
        _
    $region28: #{tpu_custom_call.1} parent=5 // pred_fallthru
      _
    %p2665 = scmp.le.s32.totalorder 2, %s8
    // Predicated region
    $region33: #{tpu_custom_call.1} parent=5 // pred_check
      %p2666 = pneg %p2665
    $region34: #{tpu_custom_call.1} parent=5 // pred_check_branch
      %2668 = sbr.rel (%p2666) target = $region36
    $region35: #{tpu_custom_call.1} parent=5 // pred_region
      %s2669 = ssub.s32 %s8, 2
      // Predicated region
      $region37: #{tpu_custom_call.1} parent=35 // pred_check
        %p2670 = pneg %p84
      $region38: #{tpu_custom_call.1} parent=35 // pred_check_branch
        %2672 = sbr.rel (%p2670) target = $region40
      $region39: #{tpu_custom_call.1} parent=35 // pred_region
        %s2673 = smul.u32 16, %s14
        %p2674 = scmp.lt.s32.totalorder %s2673, 31
        %s2675 = scalar_select %p2674, %s2673, 31
        %s2676 = smul.addr %s2675, 8
        %s2677 = scalar_lea.vmem %s2, %s2676
      $region40: #{tpu_custom_call.1} parent=35 // pred_fallthru
        _
    $region36: #{tpu_custom_call.1} parent=5 // pred_fallthru
      _
  $region6: #{tpu_custom_call.1} parent=0 // loop_footer
    %s12 = sadd.s32 1, %s8
  $region7: #{tpu_custom_call.1} parent=0 // loop_footer_branch
    %7 = sbr.rel target = $region3
  $region8: #{tpu_custom_call.1} parent=0 // loop_exit
    _

</llo_original>
